<compile_context>
chip_gen: v7x
topology: tpu7x:2x2x1
jax: 0.10.0
libtpu: 0.0.40
codegen_flags: <defaults>
</compile_context>

<pallas_src>
import functools

import jax
import jax.numpy as jnp
from jax import lax
from jax.experimental import pallas as pl
from jax.experimental.pallas import tpu as pltpu


# ---------------------------------------------------------------------------
# Pallas kernel
# ---------------------------------------------------------------------------
def _cbam_kernel(x_ref, w1t_ref, b1_ref, w2_ref, b2_ref, wm_ref, cb_ref,
                 o_ref, *, Nb, H, W, hidden):
    """Fused CBAM forward for a block of Nb images.

    x_ref  : (Nb, C, HW)     VMEM  input, spatial flattened onto the lane axis
    w1t_ref: (C, hidden)     VMEM  fc1 weight, transposed (columns = hidden units)
    b1_ref : (hidden,)       SMEM  fc1 bias
    w2_ref : (C, hidden)     VMEM  fc2 weight (PyTorch nn.Linear layout)
    b2_ref : (C, 1)          VMEM  fc2 bias, column vector
    wm_ref : (49, 2*Nb, HW)  VMEM  per-tap 7x7 weight * zero-pad validity planes
    cb_ref : (1,)            SMEM  spatial-conv bias
    o_ref  : (Nb, C, HW)     VMEM  output
    """
    HW = H * W
    x = x_ref[...].astype(jnp.float32)                           # (Nb, C, HW)

    # ---------------- channel attention ----------------
    # Global avg / max pooling over the spatial (lane) axis; one column per
    # (image, branch) so the tiny shared MLP is evaluated once for the block.
    pooled = jnp.concatenate(
        [jnp.mean(x[n], axis=1, keepdims=True) for n in range(Nb)]
        + [jnp.max(x[n], axis=1, keepdims=True) for n in range(Nb)],
        axis=1)                                                  # (C, 2*Nb)

    # Shared MLP on the VPU: a (hidden x C x 2*Nb) matmul is a negligible
    # fraction of an MXU tile, so MXU push/pop latency would dominate.
    fco = b2_ref[...]                                            # (C, 1) -> bcast
    for h in range(hidden):
        t = jnp.sum(w1t_ref[:, h:h + 1] * pooled, axis=0, keepdims=True)
        t = jnp.maximum(t + b1_ref[h], 0.0)                      # (1, 2*Nb)
        fco = fco + w2_ref[:, h:h + 1] * t                       # (C, 2*Nb)

    logits = fco[:, :Nb] + fco[:, Nb:]                           # fc(avg)+fc(max)
    ch_att = pl.reciprocal(1.0 + jnp.exp(-logits), approx=True)  # sigmoid (C, Nb)

    x_ca = [x[n] * ch_att[:, n:n + 1] for n in range(Nb)]        # each (C, HW)

    # ---------------- spatial attention ----------------
    # Channel-wise mean / max, stacked lane-dense: rows [avg_0, max_0, avg_1,
    # max_1, ...].  No (H, W) relayout, no padded scratch.
    stats = []
    for xc in x_ca:
        stats.append(jnp.mean(xc, axis=0, keepdims=True))        # (1, HW)
        stats.append(jnp.max(xc, axis=0, keepdims=True))         # (1, HW)
    maps = jnp.concatenate(stats, axis=0)                        # (2*Nb, HW)

    # 7x7 conv (2->1 ch, padding=3) directly in the flattened layout:
    # tap (dh, dw) needs maps[., p + dh*W + dw] -> one lane roll, then multiply
    # by the host-precomputed (weight * zero-pad mask) plane for that tap.
    # Four independent accumulators keep the FMA chains short (4 VALU slots).
    accs = [jnp.zeros((2 * Nb, HW), jnp.float32) for _ in range(4)]
    tap = 0
    for dh in range(-3, 4):
        for dw in range(-3, 4):
            s = dh * W + dw
            rolled = maps if s == 0 else pltpu.roll(maps, shift=(-s) % HW, axis=1)
            accs[tap % 4] = accs[tap % 4] + rolled * wm_ref[tap]
            tap += 1
    acc = (accs[0] + accs[1]) + (accs[2] + accs[3])               # (2*Nb, HW)

    for n in range(Nb):
        conv = acc[2 * n:2 * n + 1] + acc[2 * n + 1:2 * n + 2] + cb_ref[0]
        satt = pl.reciprocal(1.0 + jnp.exp(-conv), approx=True)  # sigmoid (1, HW)
        # Final dense, lane-aligned store of the doubly-attended activations.
        o_ref[n] = (x_ca[n] * satt).astype(o_ref.dtype)


# ---------------------------------------------------------------------------
# Host-side precompute: per-tap (weight * zero-pad validity) planes
# ---------------------------------------------------------------------------
def _weighted_tap_masks(conv_w, H, W):
    """(49, 2, H*W) float32: conv_w[c, kh, kw] * [input position in-bounds]."""
    HW = H * W
    hh = jnp.arange(H)[:, None]
    ww = jnp.arange(W)[None, :]
    masks = []
    for dh in range(-3, 4):
        for dw in range(-3, 4):
            valid = ((hh + dh >= 0) & (hh + dh < H)
                     & (ww + dw >= 0) & (ww + dw < W))
            masks.append(valid.reshape(HW))
    masks = jnp.stack(masks).astype(jnp.float32)                  # (49, HW)
    w_flat = conv_w.reshape(2, 49).astype(jnp.float32)            # (2, 49)
    return masks[:, None, :] * w_flat.T[:, :, None]               # (49, 2, HW)


# ---------------------------------------------------------------------------
# Wrapper
# ---------------------------------------------------------------------------
def cbam_forward(x_nchw, params):
    N, C, H, W = x_nchw.shape
    HW = H * W
    hidden = params["w1"].shape[0]
    assert HW % 128 == 0, "flattened spatial size must be a multiple of 128 lanes"
    assert C % 8 == 0, "channels must be a multiple of the 8-sublane tile"

    # Two grid steps whenever the batch splits evenly (feeds both v7x
    # TensorCores via the "parallel" axis); each step processes Nb images so
    # per-step overhead is amortized over the whole sub-batch.
    G = 2 if (N >= 2 and N % 2 == 0) else 1
    Nb = N // G

    # NCHW flattened over spatial is already the (N, C, HW) layout we want.
    x_flat = x_nchw.reshape(N, C, HW)

    wmask = _weighted_tap_masks(params["conv_w"], H, W)           # (49, 2, HW)
    if Nb > 1:
        wmask = jnp.tile(wmask, (1, Nb, 1))                       # (49, 2*Nb, HW)

    # TODO(synk): for production shapes (e.g. C=512, 56x56) on v7x, set
    # CompilerParams(vmem_limit_bytes=...) and tile HW into 128-multiple chunks.
    kernel = functools.partial(_cbam_kernel, Nb=Nb, H=H, W=W, hidden=hidden)
    out_flat = pl.pallas_call(
        kernel,
        grid=(G,),
        out_shape=jax.ShapeDtypeStruct((N, C, HW), x_nchw.dtype),
        in_specs=[
            pl.BlockSpec((Nb, C, HW), lambda b: (b, 0, 0)),
            pl.BlockSpec((C, hidden), lambda b: (0, 0)),          # w1.T
            pl.BlockSpec((hidden,), lambda b: (0,),
                         memory_space=pltpu.MemorySpace.SMEM),    # b1
            pl.BlockSpec((C, hidden), lambda b: (0, 0)),          # w2
            pl.BlockSpec((C, 1), lambda b: (0, 0)),               # b2 column
            pl.BlockSpec((49, 2 * Nb, HW), lambda b: (0, 0, 0)),  # weighted masks
            pl.BlockSpec((1,), lambda b: (0,),
                         memory_space=pltpu.MemorySpace.SMEM),    # conv bias
        ],
        out_specs=pl.BlockSpec((Nb, C, HW), lambda b: (b, 0, 0)),
        compiler_params=pltpu.CompilerParams(
            dimension_semantics=("parallel",)),
    )(x_flat,
      params["w1"].T,
      params["b1"],
      params["w2"],
      params["b2"].reshape(C, 1),
      wmask,
      params["conv_b"])
    return out_flat.reshape(N, C, H, W)


# ---------------------------------------------------------------------------
# Parameter init (deterministic, mimics nn.Linear / nn.Conv2d default init)
# ---------------------------------------------------------------------------
def init_cbam(key, channels, reduction_ratio=16):
    hidden = channels // reduction_ratio
    k1, k2, k3, k4, k5, k6 = jax.random.split(key, 6)
    s1 = 1.0 / (channels ** 0.5)
    s2 = 1.0 / (hidden ** 0.5)
    s3 = 1.0 / ((2 * 7 * 7) ** 0.5)
    return {
        "w1": jax.random.uniform(k1, (hidden, channels), jnp.float32, -s1, s1),
        "b1": jax.random.uniform(k2, (hidden,), jnp.float32, -s1, s1),
        "w2": jax.random.uniform(k3, (channels, hidden), jnp.float32, -s2, s2),
        "b2": jax.random.uniform(k4, (channels,), jnp.float32, -s2, s2),
        "conv_w": jax.random.uniform(k5, (2, 7, 7), jnp.float32, -s3, s3),
        "conv_b": jax.random.uniform(k6, (1,), jnp.float32, -s3, s3),
    }


# ---------------------------------------------------------------------------
# Pure-JAX reference for correctness check
# ---------------------------------------------------------------------------
def cbam_reference(x_nchw, params):
    w1, b1 = params["w1"], params["b1"]
    w2, b2 = params["w2"], params["b2"]
    cw, cb = params["conv_w"], params["conv_b"]

    avg = jnp.mean(x_nchw, axis=(2, 3))                           # (N, C)
    mx = jnp.max(x_nchw, axis=(2, 3))                             # (N, C)

    def mlp(v):
        h = jnp.maximum(jnp.dot(v, w1.T, precision=lax.Precision.HIGHEST) + b1, 0.0)
        return jnp.dot(h, w2.T, precision=lax.Precision.HIGHEST) + b2

    ch_att = jax.nn.sigmoid(mlp(avg) + mlp(mx))                   # (N, C)
    x1 = x_nchw * ch_att[:, :, None, None]

    sp_avg = jnp.mean(x1, axis=1, keepdims=True)                  # (N, 1, H, W)
    sp_max = jnp.max(x1, axis=1, keepdims=True)                   # (N, 1, H, W)
    sp = jnp.concatenate([sp_avg, sp_max], axis=1)                # (N, 2, H, W)
    conv = lax.conv_general_dilated(
        sp, cw[None],                                             # (1, 2, 7, 7) OIHW
        window_strides=(1, 1), padding=[(3, 3), (3, 3)],
        dimension_numbers=("NCHW", "OIHW", "NCHW"),
        precision=lax.Precision.HIGHEST) + cb.reshape(1, 1, 1, 1)
    satt = jax.nn.sigmoid(conv)                                   # (N, 1, H, W)
    return x1 * satt


# ---------------------------------------------------------------------------
if __name__ == "__main__":
    key = jax.random.PRNGKey(0)
    kx, kp = jax.random.split(key)

    # Small shapes consistent with the module: CBAM's default reduction_ratio
    # is 16, so channels must be >= 16; use batch=2, channels=32, spatial=16.
    N, C, H, W = 2, 32, 16, 16
    REDUCTION = 16

    x = jax.random.normal(kx, (N, C, H, W), jnp.float32)
    params = init_cbam(kp, C, REDUCTION)

    out = jax.block_until_ready(cbam_forward(x, params))
    assert out.shape == (N, C, H, W), out.shape

    ref = jax.block_until_ready(cbam_reference(x, params))
    err = jnp.max(jnp.abs(out - ref))
    assert err < 2e-2, f"max abs error too large: {err}"

    print("KERNEL_OK")
</pallas_src>

<mosaic_0001>
module attributes {stable_mosaic.version = 11 : i64} {
  func.func @_cbam_kernel(%arg0: i32, %arg1: memref<1x32x256xf32, #tpu.memory_space<vmem>>, %arg2: memref<32x2xf32, #tpu.memory_space<vmem>>, %arg3: memref<2xf32, #tpu.memory_space<smem>>, %arg4: memref<32x2xf32, #tpu.memory_space<vmem>>, %arg5: memref<32x1xf32, #tpu.memory_space<vmem>>, %arg6: memref<49x2x256xf32, #tpu.memory_space<vmem>>, %arg7: memref<1xf32, #tpu.memory_space<smem>>, %arg8: memref<1x32x256xf32, #tpu.memory_space<vmem>>) attributes {dimension_semantics = [#tpu.dimension_semantics<parallel>], iteration_bounds = array<i64: 2>, scalar_prefetch = 0 : i64, scratch_operands = 0 : i64, tpu.core_type = #tpu.core_type<tc>, window_params = [{transform_indices = @transform_0, window_bounds = array<i64: 1, 32, 256>}, {pipeline_mode = #tpu.pipeline_mode<synchronous>, transform_indices = @transform_1, window_bounds = array<i64: 32, 2>}, {transform_indices = @transform_2, window_bounds = array<i64: 2>}, {pipeline_mode = #tpu.pipeline_mode<synchronous>, transform_indices = @transform_3, window_bounds = array<i64: 32, 2>}, {pipeline_mode = #tpu.pipeline_mode<synchronous>, transform_indices = @transform_4, window_bounds = array<i64: 32, 1>}, {pipeline_mode = #tpu.pipeline_mode<synchronous>, transform_indices = @transform_5, window_bounds = array<i64: 49, 2, 256>}, {transform_indices = @transform_6, window_bounds = array<i64: 1>}, {transform_indices = @transform_7, window_bounds = array<i64: 1, 32, 256>}]} {
    %c0 = arith.constant 0 : index
    %c0_0 = arith.constant 0 : index
    %c0_1 = arith.constant 0 : index
    %0 = vector.load %arg1[%c0, %c0_0, %c0_1] : memref<1x32x256xf32, #tpu.memory_space<vmem>>, vector<1x32x256xf32>
    %1 = vector.shape_cast %0 : vector<1x32x256xf32> to vector<32x256xf32>
    %cst = arith.constant dense<0.000000e+00> : vector<32xf32>
    %2 = vector.multi_reduction <add>, %1, %cst [1] : vector<32x256xf32> to vector<32xf32>
    %3 = vector.shape_cast %2 : vector<32xf32> to vector<32x1xf32>
    %cst_2 = arith.constant 2.560000e+02 : f32
    %4 = vector.broadcast %cst_2 : f32 to vector<32x1xf32>
    %5 = arith.divf %3, %4 : vector<32x1xf32>
    %6 = vector.shape_cast %0 : vector<1x32x256xf32> to vector<32x256xf32>
    %cst_3 = arith.constant dense<0xFF800000> : vector<32xf32>
    %7 = vector.multi_reduction <maximumf>, %6, %cst_3 [1] : vector<32x256xf32> to vector<32xf32>
    %8 = vector.shape_cast %7 : vector<32xf32> to vector<32x1xf32>
    %9 = tpu.concatenate %5, %8 in 1 : vector<32x1xf32>, vector<32x1xf32> -> vector<32x2xf32>
    %c0_4 = arith.constant 0 : index
    %c0_5 = arith.constant 0 : index
    %10 = vector.load %arg5[%c0_4, %c0_5] : memref<32x1xf32, #tpu.memory_space<vmem>>, vector<32x1xf32>
    %c0_6 = arith.constant 0 : index
    %c0_7 = arith.constant 0 : index
    %11 = vector.load %arg2[%c0_6, %c0_7] : memref<32x2xf32, #tpu.memory_space<vmem>>, vector<32x1xf32>
    %12 = vector.broadcast %11 : vector<32x1xf32> to vector<32x2xf32>
    %13 = arith.mulf %12, %9 : vector<32x2xf32>
    %cst_8 = arith.constant dense<0.000000e+00> : vector<2xf32>
    %14 = vector.multi_reduction <add>, %13, %cst_8 [0] : vector<32x2xf32> to vector<2xf32>
    %15 = vector.shape_cast %14 : vector<2xf32> to vector<1x2xf32>
    %c0_9 = arith.constant 0 : index
    %16 = memref.load %arg3[%c0_9] : memref<2xf32, #tpu.memory_space<smem>>
    %17 = vector.broadcast %16 : f32 to vector<1x2xf32>
    %18 = arith.addf %15, %17 : vector<1x2xf32>
    %cst_10 = arith.constant 0.000000e+00 : f32
    %19 = vector.broadcast %cst_10 : f32 to vector<1x2xf32>
    %20 = arith.maximumf %18, %19 : vector<1x2xf32>
    %c0_11 = arith.constant 0 : index
    %c0_12 = arith.constant 0 : index
    %21 = vector.load %arg4[%c0_11, %c0_12] : memref<32x2xf32, #tpu.memory_space<vmem>>, vector<32x1xf32>
    %22 = vector.broadcast %21 : vector<32x1xf32> to vector<32x2xf32>
    %23 = vector.broadcast %20 : vector<1x2xf32> to vector<32x2xf32>
    %24 = arith.mulf %22, %23 : vector<32x2xf32>
    %25 = vector.broadcast %10 : vector<32x1xf32> to vector<32x2xf32>
    %26 = arith.addf %25, %24 : vector<32x2xf32>
    %c0_13 = arith.constant 0 : index
    %c1 = arith.constant 1 : index
    %27 = vector.load %arg2[%c0_13, %c1] : memref<32x2xf32, #tpu.memory_space<vmem>>, vector<32x1xf32>
    %28 = vector.broadcast %27 : vector<32x1xf32> to vector<32x2xf32>
    %29 = arith.mulf %28, %9 : vector<32x2xf32>
    %cst_14 = arith.constant dense<0.000000e+00> : vector<2xf32>
    %30 = vector.multi_reduction <add>, %29, %cst_14 [0] : vector<32x2xf32> to vector<2xf32>
    %31 = vector.shape_cast %30 : vector<2xf32> to vector<1x2xf32>
    %c1_15 = arith.constant 1 : index
    %32 = memref.load %arg3[%c1_15] : memref<2xf32, #tpu.memory_space<smem>>
    %33 = vector.broadcast %32 : f32 to vector<1x2xf32>
    %34 = arith.addf %31, %33 : vector<1x2xf32>
    %cst_16 = arith.constant 0.000000e+00 : f32
    %35 = vector.broadcast %cst_16 : f32 to vector<1x2xf32>
    %36 = arith.maximumf %34, %35 : vector<1x2xf32>
    %c0_17 = arith.constant 0 : index
    %c1_18 = arith.constant 1 : index
    %37 = vector.load %arg4[%c0_17, %c1_18] : memref<32x2xf32, #tpu.memory_space<vmem>>, vector<32x1xf32>
    %38 = vector.broadcast %37 : vector<32x1xf32> to vector<32x2xf32>
    %39 = vector.broadcast %36 : vector<1x2xf32> to vector<32x2xf32>
    %40 = arith.mulf %38, %39 : vector<32x2xf32>
    %41 = arith.addf %26, %40 : vector<32x2xf32>
    %42 = vector.extract_strided_slice %41 {offsets = [0, 0], sizes = [32, 1], strides = [1, 1]} : vector<32x2xf32> to vector<32x1xf32>
    %43 = vector.extract_strided_slice %41 {offsets = [0, 1], sizes = [32, 1], strides = [1, 1]} : vector<32x2xf32> to vector<32x1xf32>
    %44 = arith.addf %42, %43 : vector<32x1xf32>
    %cst_19 = arith.constant 0.000000e+00 : f32
    %45 = vector.broadcast %cst_19 : f32 to vector<32x1xf32>
    %46 = arith.subf %45, %44 : vector<32x1xf32>
    %47 = math.exp %46 : vector<32x1xf32>
    %cst_20 = arith.constant 1.000000e+00 : f32
    %48 = vector.broadcast %cst_20 : f32 to vector<32x1xf32>
    %49 = arith.addf %48, %47 : vector<32x1xf32>
    %50 = tpu.reciprocal %49 {approx = true} : vector<32x1xf32> -> vector<32x1xf32>
    %51 = vector.shape_cast %0 : vector<1x32x256xf32> to vector<32x256xf32>
    %52 = vector.broadcast %50 : vector<32x1xf32> to vector<32x256xf32>
    %53 = arith.mulf %51, %52 : vector<32x256xf32>
    %cst_21 = arith.constant dense<0.000000e+00> : vector<256xf32>
    %54 = vector.multi_reduction <add>, %53, %cst_21 [0] : vector<32x256xf32> to vector<256xf32>
    %55 = vector.shape_cast %54 : vector<256xf32> to vector<1x256xf32>
    %cst_22 = arith.constant 3.200000e+01 : f32
    %56 = vector.broadcast %cst_22 : f32 to vector<1x256xf32>
    %57 = arith.divf %55, %56 : vector<1x256xf32>
    %cst_23 = arith.constant dense<0xFF800000> : vector<256xf32>
    %58 = vector.multi_reduction <maximumf>, %53, %cst_23 [0] : vector<32x256xf32> to vector<256xf32>
    %59 = vector.shape_cast %58 : vector<256xf32> to vector<1x256xf32>
    %60 = tpu.concatenate %57, %59 in 0 : vector<1x256xf32>, vector<1x256xf32> -> vector<2x256xf32>
    %cst_24 = arith.constant 0.000000e+00 : f32
    %61 = vector.broadcast %cst_24 : f32 to vector<2x256xf32>
    %cst_25 = arith.constant 0.000000e+00 : f32
    %62 = vector.broadcast %cst_25 : f32 to vector<2x256xf32>
    %cst_26 = arith.constant 0.000000e+00 : f32
    %63 = vector.broadcast %cst_26 : f32 to vector<2x256xf32>
    %cst_27 = arith.constant 0.000000e+00 : f32
    %64 = vector.broadcast %cst_27 : f32 to vector<2x256xf32>
    %c51_i32 = arith.constant 51 : i32
    %65 = tpu.dynamic_rotate %60 by %c51_i32 dim 1 : vector<2x256xf32>, i32 -> vector<2x256xf32>
    %c0_28 = arith.constant 0 : index
    %c0_29 = arith.constant 0 : index
    %c0_30 = arith.constant 0 : index
    %66 = vector.load %arg6[%c0_28, %c0_29, %c0_30] : memref<49x2x256xf32, #tpu.memory_space<vmem>>, vector<1x2x256xf32>
    %67 = vector.shape_cast %66 : vector<1x2x256xf32> to vector<2x256xf32>
    %68 = arith.mulf %65, %67 : vector<2x256xf32>
    %69 = arith.addf %61, %68 : vector<2x256xf32>
    %c50_i32 = arith.constant 50 : i32
    %70 = tpu.dynamic_rotate %60 by %c50_i32 dim 1 : vector<2x256xf32>, i32 -> vector<2x256xf32>
    %c1_31 = arith.constant 1 : index
    %c0_32 = arith.constant 0 : index
    %c0_33 = arith.constant 0 : index
    %71 = vector.load %arg6[%c1_31, %c0_32, %c0_33] : memref<49x2x256xf32, #tpu.memory_space<vmem>>, vector<1x2x256xf32>
    %72 = vector.shape_cast %71 : vector<1x2x256xf32> to vector<2x256xf32>
    %73 = arith.mulf %70, %72 : vector<2x256xf32>
    %74 = arith.addf %62, %73 : vector<2x256xf32>
    %c49_i32 = arith.constant 49 : i32
    %75 = tpu.dynamic_rotate %60 by %c49_i32 dim 1 : vector<2x256xf32>, i32 -> vector<2x256xf32>
    %c2 = arith.constant 2 : index
    %c0_34 = arith.constant 0 : index
    %c0_35 = arith.constant 0 : index
    %76 = vector.load %arg6[%c2, %c0_34, %c0_35] : memref<49x2x256xf32, #tpu.memory_space<vmem>>, vector<1x2x256xf32>
    %77 = vector.shape_cast %76 : vector<1x2x256xf32> to vector<2x256xf32>
    %78 = arith.mulf %75, %77 : vector<2x256xf32>
    %79 = arith.addf %63, %78 : vector<2x256xf32>
    %c48_i32 = arith.constant 48 : i32
    %80 = tpu.dynamic_rotate %60 by %c48_i32 dim 1 : vector<2x256xf32>, i32 -> vector<2x256xf32>
    %c3 = arith.constant 3 : index
    %c0_36 = arith.constant 0 : index
    %c0_37 = arith.constant 0 : index
    %81 = vector.load %arg6[%c3, %c0_36, %c0_37] : memref<49x2x256xf32, #tpu.memory_space<vmem>>, vector<1x2x256xf32>
    %82 = vector.shape_cast %81 : vector<1x2x256xf32> to vector<2x256xf32>
    %83 = arith.mulf %80, %82 : vector<2x256xf32>
    %84 = arith.addf %64, %83 : vector<2x256xf32>
    %c47_i32 = arith.constant 47 : i32
    %85 = tpu.dynamic_rotate %60 by %c47_i32 dim 1 : vector<2x256xf32>, i32 -> vector<2x256xf32>
    %c4 = arith.constant 4 : index
    %c0_38 = arith.constant 0 : index
    %c0_39 = arith.constant 0 : index
    %86 = vector.load %arg6[%c4, %c0_38, %c0_39] : memref<49x2x256xf32, #tpu.memory_space<vmem>>, vector<1x2x256xf32>
    %87 = vector.shape_cast %86 : vector<1x2x256xf32> to vector<2x256xf32>
    %88 = arith.mulf %85, %87 : vector<2x256xf32>
    %89 = arith.addf %69, %88 : vector<2x256xf32>
    %c46_i32 = arith.constant 46 : i32
    %90 = tpu.dynamic_rotate %60 by %c46_i32 dim 1 : vector<2x256xf32>, i32 -> vector<2x256xf32>
    %c5 = arith.constant 5 : index
    %c0_40 = arith.constant 0 : index
    %c0_41 = arith.constant 0 : index
    %91 = vector.load %arg6[%c5, %c0_40, %c0_41] : memref<49x2x256xf32, #tpu.memory_space<vmem>>, vector<1x2x256xf32>
    %92 = vector.shape_cast %91 : vector<1x2x256xf32> to vector<2x256xf32>
    %93 = arith.mulf %90, %92 : vector<2x256xf32>
    %94 = arith.addf %74, %93 : vector<2x256xf32>
    %c45_i32 = arith.constant 45 : i32
    %95 = tpu.dynamic_rotate %60 by %c45_i32 dim 1 : vector<2x256xf32>, i32 -> vector<2x256xf32>
    %c6 = arith.constant 6 : index
    %c0_42 = arith.constant 0 : index
    %c0_43 = arith.constant 0 : index
    %96 = vector.load %arg6[%c6, %c0_42, %c0_43] : memref<49x2x256xf32, #tpu.memory_space<vmem>>, vector<1x2x256xf32>
    %97 = vector.shape_cast %96 : vector<1x2x256xf32> to vector<2x256xf32>
    %98 = arith.mulf %95, %97 : vector<2x256xf32>
    %99 = arith.addf %79, %98 : vector<2x256xf32>
    %c35_i32 = arith.constant 35 : i32
    %100 = tpu.dynamic_rotate %60 by %c35_i32 dim 1 : vector<2x256xf32>, i32 -> vector<2x256xf32>
    %c7 = arith.constant 7 : index
    %c0_44 = arith.constant 0 : index
    %c0_45 = arith.constant 0 : index
    %101 = vector.load %arg6[%c7, %c0_44, %c0_45] : memref<49x2x256xf32, #tpu.memory_space<vmem>>, vector<1x2x256xf32>
    %102 = vector.shape_cast %101 : vector<1x2x256xf32> to vector<2x256xf32>
    %103 = arith.mulf %100, %102 : vector<2x256xf32>
    %104 = arith.addf %84, %103 : vector<2x256xf32>
    %c34_i32 = arith.constant 34 : i32
    %105 = tpu.dynamic_rotate %60 by %c34_i32 dim 1 : vector<2x256xf32>, i32 -> vector<2x256xf32>
    %c8 = arith.constant 8 : index
    %c0_46 = arith.constant 0 : index
    %c0_47 = arith.constant 0 : index
    %106 = vector.load %arg6[%c8, %c0_46, %c0_47] : memref<49x2x256xf32, #tpu.memory_space<vmem>>, vector<1x2x256xf32>
    %107 = vector.shape_cast %106 : vector<1x2x256xf32> to vector<2x256xf32>
    %108 = arith.mulf %105, %107 : vector<2x256xf32>
    %109 = arith.addf %89, %108 : vector<2x256xf32>
    %c33_i32 = arith.constant 33 : i32
    %110 = tpu.dynamic_rotate %60 by %c33_i32 dim 1 : vector<2x256xf32>, i32 -> vector<2x256xf32>
    %c9 = arith.constant 9 : index
    %c0_48 = arith.constant 0 : index
    %c0_49 = arith.constant 0 : index
    %111 = vector.load %arg6[%c9, %c0_48, %c0_49] : memref<49x2x256xf32, #tpu.memory_space<vmem>>, vector<1x2x256xf32>
    %112 = vector.shape_cast %111 : vector<1x2x256xf32> to vector<2x256xf32>
    %113 = arith.mulf %110, %112 : vector<2x256xf32>
    %114 = arith.addf %94, %113 : vector<2x256xf32>
    %c32_i32 = arith.constant 32 : i32
    %115 = tpu.dynamic_rotate %60 by %c32_i32 dim 1 : vector<2x256xf32>, i32 -> vector<2x256xf32>
    %c10 = arith.constant 10 : index
    %c0_50 = arith.constant 0 : index
    %c0_51 = arith.constant 0 : index
    %116 = vector.load %arg6[%c10, %c0_50, %c0_51] : memref<49x2x256xf32, #tpu.memory_space<vmem>>, vector<1x2x256xf32>
    %117 = vector.shape_cast %116 : vector<1x2x256xf32> to vector<2x256xf32>
    %118 = arith.mulf %115, %117 : vector<2x256xf32>
    %119 = arith.addf %99, %118 : vector<2x256xf32>
    %c31_i32 = arith.constant 31 : i32
    %120 = tpu.dynamic_rotate %60 by %c31_i32 dim 1 : vector<2x256xf32>, i32 -> vector<2x256xf32>
    %c11 = arith.constant 11 : index
    %c0_52 = arith.constant 0 : index
    %c0_53 = arith.constant 0 : index
    %121 = vector.load %arg6[%c11, %c0_52, %c0_53] : memref<49x2x256xf32, #tpu.memory_space<vmem>>, vector<1x2x256xf32>
    %122 = vector.shape_cast %121 : vector<1x2x256xf32> to vector<2x256xf32>
    %123 = arith.mulf %120, %122 : vector<2x256xf32>
    %124 = arith.addf %104, %123 : vector<2x256xf32>
    %c30_i32 = arith.constant 30 : i32
    %125 = tpu.dynamic_rotate %60 by %c30_i32 dim 1 : vector<2x256xf32>, i32 -> vector<2x256xf32>
    %c12 = arith.constant 12 : index
    %c0_54 = arith.constant 0 : index
    %c0_55 = arith.constant 0 : index
    %126 = vector.load %arg6[%c12, %c0_54, %c0_55] : memref<49x2x256xf32, #tpu.memory_space<vmem>>, vector<1x2x256xf32>
    %127 = vector.shape_cast %126 : vector<1x2x256xf32> to vector<2x256xf32>
    %128 = arith.mulf %125, %127 : vector<2x256xf32>
    %129 = arith.addf %109, %128 : vector<2x256xf32>
    %c29_i32 = arith.constant 29 : i32
    %130 = tpu.dynamic_rotate %60 by %c29_i32 dim 1 : vector<2x256xf32>, i32 -> vector<2x256xf32>
    %c13 = arith.constant 13 : index
    %c0_56 = arith.constant 0 : index
    %c0_57 = arith.constant 0 : index
    %131 = vector.load %arg6[%c13, %c0_56, %c0_57] : memref<49x2x256xf32, #tpu.memory_space<vmem>>, vector<1x2x256xf32>
    %132 = vector.shape_cast %131 : vector<1x2x256xf32> to vector<2x256xf32>
    %133 = arith.mulf %130, %132 : vector<2x256xf32>
    %134 = arith.addf %114, %133 : vector<2x256xf32>
    %c19_i32 = arith.constant 19 : i32
    %135 = tpu.dynamic_rotate %60 by %c19_i32 dim 1 : vector<2x256xf32>, i32 -> vector<2x256xf32>
    %c14 = arith.constant 14 : index
    %c0_58 = arith.constant 0 : index
    %c0_59 = arith.constant 0 : index
    %136 = vector.load %arg6[%c14, %c0_58, %c0_59] : memref<49x2x256xf32, #tpu.memory_space<vmem>>, vector<1x2x256xf32>
    %137 = vector.shape_cast %136 : vector<1x2x256xf32> to vector<2x256xf32>
    %138 = arith.mulf %135, %137 : vector<2x256xf32>
    %139 = arith.addf %119, %138 : vector<2x256xf32>
    %c18_i32 = arith.constant 18 : i32
    %140 = tpu.dynamic_rotate %60 by %c18_i32 dim 1 : vector<2x256xf32>, i32 -> vector<2x256xf32>
    %c15 = arith.constant 15 : index
    %c0_60 = arith.constant 0 : index
    %c0_61 = arith.constant 0 : index
    %141 = vector.load %arg6[%c15, %c0_60, %c0_61] : memref<49x2x256xf32, #tpu.memory_space<vmem>>, vector<1x2x256xf32>
    %142 = vector.shape_cast %141 : vector<1x2x256xf32> to vector<2x256xf32>
    %143 = arith.mulf %140, %142 : vector<2x256xf32>
    %144 = arith.addf %124, %143 : vector<2x256xf32>
    %c17_i32 = arith.constant 17 : i32
    %145 = tpu.dynamic_rotate %60 by %c17_i32 dim 1 : vector<2x256xf32>, i32 -> vector<2x256xf32>
    %c16 = arith.constant 16 : index
    %c0_62 = arith.constant 0 : index
    %c0_63 = arith.constant 0 : index
    %146 = vector.load %arg6[%c16, %c0_62, %c0_63] : memref<49x2x256xf32, #tpu.memory_space<vmem>>, vector<1x2x256xf32>
    %147 = vector.shape_cast %146 : vector<1x2x256xf32> to vector<2x256xf32>
    %148 = arith.mulf %145, %147 : vector<2x256xf32>
    %149 = arith.addf %129, %148 : vector<2x256xf32>
    %c16_i32 = arith.constant 16 : i32
    %150 = tpu.dynamic_rotate %60 by %c16_i32 dim 1 : vector<2x256xf32>, i32 -> vector<2x256xf32>
    %c17 = arith.constant 17 : index
    %c0_64 = arith.constant 0 : index
    %c0_65 = arith.constant 0 : index
    %151 = vector.load %arg6[%c17, %c0_64, %c0_65] : memref<49x2x256xf32, #tpu.memory_space<vmem>>, vector<1x2x256xf32>
    %152 = vector.shape_cast %151 : vector<1x2x256xf32> to vector<2x256xf32>
    %153 = arith.mulf %150, %152 : vector<2x256xf32>
    %154 = arith.addf %134, %153 : vector<2x256xf32>
    %c15_i32 = arith.constant 15 : i32
    %155 = tpu.dynamic_rotate %60 by %c15_i32 dim 1 : vector<2x256xf32>, i32 -> vector<2x256xf32>
    %c18 = arith.constant 18 : index
    %c0_66 = arith.constant 0 : index
    %c0_67 = arith.constant 0 : index
    %156 = vector.load %arg6[%c18, %c0_66, %c0_67] : memref<49x2x256xf32, #tpu.memory_space<vmem>>, vector<1x2x256xf32>
    %157 = vector.shape_cast %156 : vector<1x2x256xf32> to vector<2x256xf32>
    %158 = arith.mulf %155, %157 : vector<2x256xf32>
    %159 = arith.addf %139, %158 : vector<2x256xf32>
    %c14_i32 = arith.constant 14 : i32
    %160 = tpu.dynamic_rotate %60 by %c14_i32 dim 1 : vector<2x256xf32>, i32 -> vector<2x256xf32>
    %c19 = arith.constant 19 : index
    %c0_68 = arith.constant 0 : index
    %c0_69 = arith.constant 0 : index
    %161 = vector.load %arg6[%c19, %c0_68, %c0_69] : memref<49x2x256xf32, #tpu.memory_space<vmem>>, vector<1x2x256xf32>
    %162 = vector.shape_cast %161 : vector<1x2x256xf32> to vector<2x256xf32>
    %163 = arith.mulf %160, %162 : vector<2x256xf32>
    %164 = arith.addf %144, %163 : vector<2x256xf32>
    %c13_i32 = arith.constant 13 : i32
    %165 = tpu.dynamic_rotate %60 by %c13_i32 dim 1 : vector<2x256xf32>, i32 -> vector<2x256xf32>
    %c20 = arith.constant 20 : index
    %c0_70 = arith.constant 0 : index
    %c0_71 = arith.constant 0 : index
    %166 = vector.load %arg6[%c20, %c0_70, %c0_71] : memref<49x2x256xf32, #tpu.memory_space<vmem>>, vector<1x2x256xf32>
    %167 = vector.shape_cast %166 : vector<1x2x256xf32> to vector<2x256xf32>
    %168 = arith.mulf %165, %167 : vector<2x256xf32>
    %169 = arith.addf %149, %168 : vector<2x256xf32>
    %c3_i32 = arith.constant 3 : i32
    %170 = tpu.dynamic_rotate %60 by %c3_i32 dim 1 : vector<2x256xf32>, i32 -> vector<2x256xf32>
    %c21 = arith.constant 21 : index
    %c0_72 = arith.constant 0 : index
    %c0_73 = arith.constant 0 : index
    %171 = vector.load %arg6[%c21, %c0_72, %c0_73] : memref<49x2x256xf32, #tpu.memory_space<vmem>>, vector<1x2x256xf32>
    %172 = vector.shape_cast %171 : vector<1x2x256xf32> to vector<2x256xf32>
    %173 = arith.mulf %170, %172 : vector<2x256xf32>
    %174 = arith.addf %154, %173 : vector<2x256xf32>
    %c2_i32 = arith.constant 2 : i32
    %175 = tpu.dynamic_rotate %60 by %c2_i32 dim 1 : vector<2x256xf32>, i32 -> vector<2x256xf32>
    %c22 = arith.constant 22 : index
    %c0_74 = arith.constant 0 : index
    %c0_75 = arith.constant 0 : index
    %176 = vector.load %arg6[%c22, %c0_74, %c0_75] : memref<49x2x256xf32, #tpu.memory_space<vmem>>, vector<1x2x256xf32>
    %177 = vector.shape_cast %176 : vector<1x2x256xf32> to vector<2x256xf32>
    %178 = arith.mulf %175, %177 : vector<2x256xf32>
    %179 = arith.addf %159, %178 : vector<2x256xf32>
    %c1_i32 = arith.constant 1 : i32
    %180 = tpu.dynamic_rotate %60 by %c1_i32 dim 1 : vector<2x256xf32>, i32 -> vector<2x256xf32>
    %c23 = arith.constant 23 : index
    %c0_76 = arith.constant 0 : index
    %c0_77 = arith.constant 0 : index
    %181 = vector.load %arg6[%c23, %c0_76, %c0_77] : memref<49x2x256xf32, #tpu.memory_space<vmem>>, vector<1x2x256xf32>
    %182 = vector.shape_cast %181 : vector<1x2x256xf32> to vector<2x256xf32>
    %183 = arith.mulf %180, %182 : vector<2x256xf32>
    %184 = arith.addf %164, %183 : vector<2x256xf32>
    %c24 = arith.constant 24 : index
    %c0_78 = arith.constant 0 : index
    %c0_79 = arith.constant 0 : index
    %185 = vector.load %arg6[%c24, %c0_78, %c0_79] : memref<49x2x256xf32, #tpu.memory_space<vmem>>, vector<1x2x256xf32>
    %186 = vector.shape_cast %185 : vector<1x2x256xf32> to vector<2x256xf32>
    %187 = arith.mulf %60, %186 : vector<2x256xf32>
    %188 = arith.addf %169, %187 : vector<2x256xf32>
    %c255_i32 = arith.constant 255 : i32
    %189 = tpu.dynamic_rotate %60 by %c255_i32 dim 1 : vector<2x256xf32>, i32 -> vector<2x256xf32>
    %c25 = arith.constant 25 : index
    %c0_80 = arith.constant 0 : index
    %c0_81 = arith.constant 0 : index
    %190 = vector.load %arg6[%c25, %c0_80, %c0_81] : memref<49x2x256xf32, #tpu.memory_space<vmem>>, vector<1x2x256xf32>
    %191 = vector.shape_cast %190 : vector<1x2x256xf32> to vector<2x256xf32>
    %192 = arith.mulf %189, %191 : vector<2x256xf32>
    %193 = arith.addf %174, %192 : vector<2x256xf32>
    %c254_i32 = arith.constant 254 : i32
    %194 = tpu.dynamic_rotate %60 by %c254_i32 dim 1 : vector<2x256xf32>, i32 -> vector<2x256xf32>
    %c26 = arith.constant 26 : index
    %c0_82 = arith.constant 0 : index
    %c0_83 = arith.constant 0 : index
    %195 = vector.load %arg6[%c26, %c0_82, %c0_83] : memref<49x2x256xf32, #tpu.memory_space<vmem>>, vector<1x2x256xf32>
    %196 = vector.shape_cast %195 : vector<1x2x256xf32> to vector<2x256xf32>
    %197 = arith.mulf %194, %196 : vector<2x256xf32>
    %198 = arith.addf %179, %197 : vector<2x256xf32>
    %c253_i32 = arith.constant 253 : i32
    %199 = tpu.dynamic_rotate %60 by %c253_i32 dim 1 : vector<2x256xf32>, i32 -> vector<2x256xf32>
    %c27 = arith.constant 27 : index
    %c0_84 = arith.constant 0 : index
    %c0_85 = arith.constant 0 : index
    %200 = vector.load %arg6[%c27, %c0_84, %c0_85] : memref<49x2x256xf32, #tpu.memory_space<vmem>>, vector<1x2x256xf32>
    %201 = vector.shape_cast %200 : vector<1x2x256xf32> to vector<2x256xf32>
    %202 = arith.mulf %199, %201 : vector<2x256xf32>
    %203 = arith.addf %184, %202 : vector<2x256xf32>
    %c243_i32 = arith.constant 243 : i32
    %204 = tpu.dynamic_rotate %60 by %c243_i32 dim 1 : vector<2x256xf32>, i32 -> vector<2x256xf32>
    %c28 = arith.constant 28 : index
    %c0_86 = arith.constant 0 : index
    %c0_87 = arith.constant 0 : index
    %205 = vector.load %arg6[%c28, %c0_86, %c0_87] : memref<49x2x256xf32, #tpu.memory_space<vmem>>, vector<1x2x256xf32>
    %206 = vector.shape_cast %205 : vector<1x2x256xf32> to vector<2x256xf32>
    %207 = arith.mulf %204, %206 : vector<2x256xf32>
    %208 = arith.addf %188, %207 : vector<2x256xf32>
    %c242_i32 = arith.constant 242 : i32
    %209 = tpu.dynamic_rotate %60 by %c242_i32 dim 1 : vector<2x256xf32>, i32 -> vector<2x256xf32>
    %c29 = arith.constant 29 : index
    %c0_88 = arith.constant 0 : index
    %c0_89 = arith.constant 0 : index
    %210 = vector.load %arg6[%c29, %c0_88, %c0_89] : memref<49x2x256xf32, #tpu.memory_space<vmem>>, vector<1x2x256xf32>
    %211 = vector.shape_cast %210 : vector<1x2x256xf32> to vector<2x256xf32>
    %212 = arith.mulf %209, %211 : vector<2x256xf32>
    %213 = arith.addf %193, %212 : vector<2x256xf32>
    %c241_i32 = arith.constant 241 : i32
    %214 = tpu.dynamic_rotate %60 by %c241_i32 dim 1 : vector<2x256xf32>, i32 -> vector<2x256xf32>
    %c30 = arith.constant 30 : index
    %c0_90 = arith.constant 0 : index
    %c0_91 = arith.constant 0 : index
    %215 = vector.load %arg6[%c30, %c0_90, %c0_91] : memref<49x2x256xf32, #tpu.memory_space<vmem>>, vector<1x2x256xf32>
    %216 = vector.shape_cast %215 : vector<1x2x256xf32> to vector<2x256xf32>
    %217 = arith.mulf %214, %216 : vector<2x256xf32>
    %218 = arith.addf %198, %217 : vector<2x256xf32>
    %c240_i32 = arith.constant 240 : i32
    %219 = tpu.dynamic_rotate %60 by %c240_i32 dim 1 : vector<2x256xf32>, i32 -> vector<2x256xf32>
    %c31 = arith.constant 31 : index
    %c0_92 = arith.constant 0 : index
    %c0_93 = arith.constant 0 : index
    %220 = vector.load %arg6[%c31, %c0_92, %c0_93] : memref<49x2x256xf32, #tpu.memory_space<vmem>>, vector<1x2x256xf32>
    %221 = vector.shape_cast %220 : vector<1x2x256xf32> to vector<2x256xf32>
    %222 = arith.mulf %219, %221 : vector<2x256xf32>
    %223 = arith.addf %203, %222 : vector<2x256xf32>
    %c239_i32 = arith.constant 239 : i32
    %224 = tpu.dynamic_rotate %60 by %c239_i32 dim 1 : vector<2x256xf32>, i32 -> vector<2x256xf32>
    %c32 = arith.constant 32 : index
    %c0_94 = arith.constant 0 : index
    %c0_95 = arith.constant 0 : index
    %225 = vector.load %arg6[%c32, %c0_94, %c0_95] : memref<49x2x256xf32, #tpu.memory_space<vmem>>, vector<1x2x256xf32>
    %226 = vector.shape_cast %225 : vector<1x2x256xf32> to vector<2x256xf32>
    %227 = arith.mulf %224, %226 : vector<2x256xf32>
    %228 = arith.addf %208, %227 : vector<2x256xf32>
    %c238_i32 = arith.constant 238 : i32
    %229 = tpu.dynamic_rotate %60 by %c238_i32 dim 1 : vector<2x256xf32>, i32 -> vector<2x256xf32>
    %c33 = arith.constant 33 : index
    %c0_96 = arith.constant 0 : index
    %c0_97 = arith.constant 0 : index
    %230 = vector.load %arg6[%c33, %c0_96, %c0_97] : memref<49x2x256xf32, #tpu.memory_space<vmem>>, vector<1x2x256xf32>
    %231 = vector.shape_cast %230 : vector<1x2x256xf32> to vector<2x256xf32>
    %232 = arith.mulf %229, %231 : vector<2x256xf32>
    %233 = arith.addf %213, %232 : vector<2x256xf32>
    %c237_i32 = arith.constant 237 : i32
    %234 = tpu.dynamic_rotate %60 by %c237_i32 dim 1 : vector<2x256xf32>, i32 -> vector<2x256xf32>
    %c34 = arith.constant 34 : index
    %c0_98 = arith.constant 0 : index
    %c0_99 = arith.constant 0 : index
    %235 = vector.load %arg6[%c34, %c0_98, %c0_99] : memref<49x2x256xf32, #tpu.memory_space<vmem>>, vector<1x2x256xf32>
    %236 = vector.shape_cast %235 : vector<1x2x256xf32> to vector<2x256xf32>
    %237 = arith.mulf %234, %236 : vector<2x256xf32>
    %238 = arith.addf %218, %237 : vector<2x256xf32>
    %c227_i32 = arith.constant 227 : i32
    %239 = tpu.dynamic_rotate %60 by %c227_i32 dim 1 : vector<2x256xf32>, i32 -> vector<2x256xf32>
    %c35 = arith.constant 35 : index
    %c0_100 = arith.constant 0 : index
    %c0_101 = arith.constant 0 : index
    %240 = vector.load %arg6[%c35, %c0_100, %c0_101] : memref<49x2x256xf32, #tpu.memory_space<vmem>>, vector<1x2x256xf32>
    %241 = vector.shape_cast %240 : vector<1x2x256xf32> to vector<2x256xf32>
    %242 = arith.mulf %239, %241 : vector<2x256xf32>
    %243 = arith.addf %223, %242 : vector<2x256xf32>
    %c226_i32 = arith.constant 226 : i32
    %244 = tpu.dynamic_rotate %60 by %c226_i32 dim 1 : vector<2x256xf32>, i32 -> vector<2x256xf32>
    %c36 = arith.constant 36 : index
    %c0_102 = arith.constant 0 : index
    %c0_103 = arith.constant 0 : index
    %245 = vector.load %arg6[%c36, %c0_102, %c0_103] : memref<49x2x256xf32, #tpu.memory_space<vmem>>, vector<1x2x256xf32>
    %246 = vector.shape_cast %245 : vector<1x2x256xf32> to vector<2x256xf32>
    %247 = arith.mulf %244, %246 : vector<2x256xf32>
    %248 = arith.addf %228, %247 : vector<2x256xf32>
    %c225_i32 = arith.constant 225 : i32
    %249 = tpu.dynamic_rotate %60 by %c225_i32 dim 1 : vector<2x256xf32>, i32 -> vector<2x256xf32>
    %c37 = arith.constant 37 : index
    %c0_104 = arith.constant 0 : index
    %c0_105 = arith.constant 0 : index
    %250 = vector.load %arg6[%c37, %c0_104, %c0_105] : memref<49x2x256xf32, #tpu.memory_space<vmem>>, vector<1x2x256xf32>
    %251 = vector.shape_cast %250 : vector<1x2x256xf32> to vector<2x256xf32>
    %252 = arith.mulf %249, %251 : vector<2x256xf32>
    %253 = arith.addf %233, %252 : vector<2x256xf32>
    %c224_i32 = arith.constant 224 : i32
    %254 = tpu.dynamic_rotate %60 by %c224_i32 dim 1 : vector<2x256xf32>, i32 -> vector<2x256xf32>
    %c38 = arith.constant 38 : index
    %c0_106 = arith.constant 0 : index
    %c0_107 = arith.constant 0 : index
    %255 = vector.load %arg6[%c38, %c0_106, %c0_107] : memref<49x2x256xf32, #tpu.memory_space<vmem>>, vector<1x2x256xf32>
    %256 = vector.shape_cast %255 : vector<1x2x256xf32> to vector<2x256xf32>
    %257 = arith.mulf %254, %256 : vector<2x256xf32>
    %258 = arith.addf %238, %257 : vector<2x256xf32>
    %c223_i32 = arith.constant 223 : i32
    %259 = tpu.dynamic_rotate %60 by %c223_i32 dim 1 : vector<2x256xf32>, i32 -> vector<2x256xf32>
    %c39 = arith.constant 39 : index
    %c0_108 = arith.constant 0 : index
    %c0_109 = arith.constant 0 : index
    %260 = vector.load %arg6[%c39, %c0_108, %c0_109] : memref<49x2x256xf32, #tpu.memory_space<vmem>>, vector<1x2x256xf32>
    %261 = vector.shape_cast %260 : vector<1x2x256xf32> to vector<2x256xf32>
    %262 = arith.mulf %259, %261 : vector<2x256xf32>
    %263 = arith.addf %243, %262 : vector<2x256xf32>
    %c222_i32 = arith.constant 222 : i32
    %264 = tpu.dynamic_rotate %60 by %c222_i32 dim 1 : vector<2x256xf32>, i32 -> vector<2x256xf32>
    %c40 = arith.constant 40 : index
    %c0_110 = arith.constant 0 : index
    %c0_111 = arith.constant 0 : index
    %265 = vector.load %arg6[%c40, %c0_110, %c0_111] : memref<49x2x256xf32, #tpu.memory_space<vmem>>, vector<1x2x256xf32>
    %266 = vector.shape_cast %265 : vector<1x2x256xf32> to vector<2x256xf32>
    %267 = arith.mulf %264, %266 : vector<2x256xf32>
    %268 = arith.addf %248, %267 : vector<2x256xf32>
    %c221_i32 = arith.constant 221 : i32
    %269 = tpu.dynamic_rotate %60 by %c221_i32 dim 1 : vector<2x256xf32>, i32 -> vector<2x256xf32>
    %c41 = arith.constant 41 : index
    %c0_112 = arith.constant 0 : index
    %c0_113 = arith.constant 0 : index
    %270 = vector.load %arg6[%c41, %c0_112, %c0_113] : memref<49x2x256xf32, #tpu.memory_space<vmem>>, vector<1x2x256xf32>
    %271 = vector.shape_cast %270 : vector<1x2x256xf32> to vector<2x256xf32>
    %272 = arith.mulf %269, %271 : vector<2x256xf32>
    %273 = arith.addf %253, %272 : vector<2x256xf32>
    %c211_i32 = arith.constant 211 : i32
    %274 = tpu.dynamic_rotate %60 by %c211_i32 dim 1 : vector<2x256xf32>, i32 -> vector<2x256xf32>
    %c42 = arith.constant 42 : index
    %c0_114 = arith.constant 0 : index
    %c0_115 = arith.constant 0 : index
    %275 = vector.load %arg6[%c42, %c0_114, %c0_115] : memref<49x2x256xf32, #tpu.memory_space<vmem>>, vector<1x2x256xf32>
    %276 = vector.shape_cast %275 : vector<1x2x256xf32> to vector<2x256xf32>
    %277 = arith.mulf %274, %276 : vector<2x256xf32>
    %278 = arith.addf %258, %277 : vector<2x256xf32>
    %c210_i32 = arith.constant 210 : i32
    %279 = tpu.dynamic_rotate %60 by %c210_i32 dim 1 : vector<2x256xf32>, i32 -> vector<2x256xf32>
    %c43 = arith.constant 43 : index
    %c0_116 = arith.constant 0 : index
    %c0_117 = arith.constant 0 : index
    %280 = vector.load %arg6[%c43, %c0_116, %c0_117] : memref<49x2x256xf32, #tpu.memory_space<vmem>>, vector<1x2x256xf32>
    %281 = vector.shape_cast %280 : vector<1x2x256xf32> to vector<2x256xf32>
    %282 = arith.mulf %279, %281 : vector<2x256xf32>
    %283 = arith.addf %263, %282 : vector<2x256xf32>
    %c209_i32 = arith.constant 209 : i32
    %284 = tpu.dynamic_rotate %60 by %c209_i32 dim 1 : vector<2x256xf32>, i32 -> vector<2x256xf32>
    %c44 = arith.constant 44 : index
    %c0_118 = arith.constant 0 : index
    %c0_119 = arith.constant 0 : index
    %285 = vector.load %arg6[%c44, %c0_118, %c0_119] : memref<49x2x256xf32, #tpu.memory_space<vmem>>, vector<1x2x256xf32>
    %286 = vector.shape_cast %285 : vector<1x2x256xf32> to vector<2x256xf32>
    %287 = arith.mulf %284, %286 : vector<2x256xf32>
    %288 = arith.addf %268, %287 : vector<2x256xf32>
    %c208_i32 = arith.constant 208 : i32
    %289 = tpu.dynamic_rotate %60 by %c208_i32 dim 1 : vector<2x256xf32>, i32 -> vector<2x256xf32>
    %c45 = arith.constant 45 : index
    %c0_120 = arith.constant 0 : index
    %c0_121 = arith.constant 0 : index
    %290 = vector.load %arg6[%c45, %c0_120, %c0_121] : memref<49x2x256xf32, #tpu.memory_space<vmem>>, vector<1x2x256xf32>
    %291 = vector.shape_cast %290 : vector<1x2x256xf32> to vector<2x256xf32>
    %292 = arith.mulf %289, %291 : vector<2x256xf32>
    %293 = arith.addf %273, %292 : vector<2x256xf32>
    %c207_i32 = arith.constant 207 : i32
    %294 = tpu.dynamic_rotate %60 by %c207_i32 dim 1 : vector<2x256xf32>, i32 -> vector<2x256xf32>
    %c46 = arith.constant 46 : index
    %c0_122 = arith.constant 0 : index
    %c0_123 = arith.constant 0 : index
    %295 = vector.load %arg6[%c46, %c0_122, %c0_123] : memref<49x2x256xf32, #tpu.memory_space<vmem>>, vector<1x2x256xf32>
    %296 = vector.shape_cast %295 : vector<1x2x256xf32> to vector<2x256xf32>
    %297 = arith.mulf %294, %296 : vector<2x256xf32>
    %298 = arith.addf %278, %297 : vector<2x256xf32>
    %c206_i32 = arith.constant 206 : i32
    %299 = tpu.dynamic_rotate %60 by %c206_i32 dim 1 : vector<2x256xf32>, i32 -> vector<2x256xf32>
    %c47 = arith.constant 47 : index
    %c0_124 = arith.constant 0 : index
    %c0_125 = arith.constant 0 : index
    %300 = vector.load %arg6[%c47, %c0_124, %c0_125] : memref<49x2x256xf32, #tpu.memory_space<vmem>>, vector<1x2x256xf32>
    %301 = vector.shape_cast %300 : vector<1x2x256xf32> to vector<2x256xf32>
    %302 = arith.mulf %299, %301 : vector<2x256xf32>
    %303 = arith.addf %283, %302 : vector<2x256xf32>
    %c205_i32 = arith.constant 205 : i32
    %304 = tpu.dynamic_rotate %60 by %c205_i32 dim 1 : vector<2x256xf32>, i32 -> vector<2x256xf32>
    %c48 = arith.constant 48 : index
    %c0_126 = arith.constant 0 : index
    %c0_127 = arith.constant 0 : index
    %305 = vector.load %arg6[%c48, %c0_126, %c0_127] : memref<49x2x256xf32, #tpu.memory_space<vmem>>, vector<1x2x256xf32>
    %306 = vector.shape_cast %305 : vector<1x2x256xf32> to vector<2x256xf32>
    %307 = arith.mulf %304, %306 : vector<2x256xf32>
    %308 = arith.addf %288, %307 : vector<2x256xf32>
    %309 = arith.addf %308, %293 : vector<2x256xf32>
    %310 = arith.addf %298, %303 : vector<2x256xf32>
    %311 = arith.addf %309, %310 : vector<2x256xf32>
    %312 = vector.extract_strided_slice %311 {offsets = [0, 0], sizes = [1, 256], strides = [1, 1]} : vector<2x256xf32> to vector<1x256xf32>
    %313 = vector.extract_strided_slice %311 {offsets = [1, 0], sizes = [1, 256], strides = [1, 1]} : vector<2x256xf32> to vector<1x256xf32>
    %314 = arith.addf %312, %313 : vector<1x256xf32>
    %c0_128 = arith.constant 0 : index
    %315 = memref.load %arg7[%c0_128] : memref<1xf32, #tpu.memory_space<smem>>
    %316 = vector.broadcast %315 : f32 to vector<1x256xf32>
    %317 = arith.addf %314, %316 : vector<1x256xf32>
    %cst_129 = arith.constant 0.000000e+00 : f32
    %318 = vector.broadcast %cst_129 : f32 to vector<1x256xf32>
    %319 = arith.subf %318, %317 : vector<1x256xf32>
    %320 = math.exp %319 : vector<1x256xf32>
    %cst_130 = arith.constant 1.000000e+00 : f32
    %321 = vector.broadcast %cst_130 : f32 to vector<1x256xf32>
    %322 = arith.addf %321, %320 : vector<1x256xf32>
    %323 = tpu.reciprocal %322 {approx = true} : vector<1x256xf32> -> vector<1x256xf32>
    %324 = vector.broadcast %323 : vector<1x256xf32> to vector<32x256xf32>
    %325 = arith.mulf %53, %324 : vector<32x256xf32>
    %c0_131 = arith.constant 0 : index
    %c0_132 = arith.constant 0 : index
    %c0_133 = arith.constant 0 : index
    %326 = vector.load %arg8[%c0_131, %c0_132, %c0_133] : memref<1x32x256xf32, #tpu.memory_space<vmem>>, vector<1x32x256xf32>
    %327 = vector.shape_cast %326 : vector<1x32x256xf32> to vector<32x256xf32>
    %328 = vector.shape_cast %325 : vector<32x256xf32> to vector<1x32x256xf32>
    tpu.vector_store %arg8[%c0_131, %c0_132, %c0_133], %328 {strides = array<i32>} : memref<1x32x256xf32, #tpu.memory_space<vmem>>, vector<1x32x256xf32>,
    return
  }
  func.func @transform_0(%arg0: i32) -> (i32, i32, i32) {
    %c0_i32 = arith.constant 0 : i32
    %c0_i32_0 = arith.constant 0 : i32
    %c0_i32_1 = arith.constant 0 : i32
    return %arg0, %c0_i32, %c0_i32_0 : i32, i32, i32
  }
  func.func @transform_1(%arg0: i32) -> (i32, i32) {
    %c0_i32 = arith.constant 0 : i32
    %c0_i32_0 = arith.constant 0 : i32
    %c0_i32_1 = arith.constant 0 : i32
    return %c0_i32, %c0_i32_0 : i32, i32
  }
  func.func @transform_2(%arg0: i32) -> i32 {
    %c0_i32 = arith.constant 0 : i32
    %c0_i32_0 = arith.constant 0 : i32
    return %c0_i32 : i32
  }
  func.func @transform_3(%arg0: i32) -> (i32, i32) {
    %c0_i32 = arith.constant 0 : i32
    %c0_i32_0 = arith.constant 0 : i32
    %c0_i32_1 = arith.constant 0 : i32
    return %c0_i32, %c0_i32_0 : i32, i32
  }
  func.func @transform_4(%arg0: i32) -> (i32, i32) {
    %c0_i32 = arith.constant 0 : i32
    %c0_i32_0 = arith.constant 0 : i32
    %c0_i32_1 = arith.constant 0 : i32
    return %c0_i32, %c0_i32_0 : i32, i32
  }
  func.func @transform_5(%arg0: i32) -> (i32, i32, i32) {
    %c0_i32 = arith.constant 0 : i32
    %c0_i32_0 = arith.constant 0 : i32
    %c0_i32_1 = arith.constant 0 : i32
    %c0_i32_2 = arith.constant 0 : i32
    return %c0_i32, %c0_i32_0, %c0_i32_1 : i32, i32, i32
  }
  func.func @transform_6(%arg0: i32) -> i32 {
    %c0_i32 = arith.constant 0 : i32
    %c0_i32_0 = arith.constant 0 : i32
    return %c0_i32 : i32
  }
  func.func @transform_7(%arg0: i32) -> (i32, i32, i32) {
    %c0_i32 = arith.constant 0 : i32
    %c0_i32_0 = arith.constant 0 : i32
    %c0_i32_1 = arith.constant 0 : i32
    return %arg0, %c0_i32, %c0_i32_0 : i32, i32, i32
  }
}

</mosaic_0001>

<llo_original>
// kernel: tpu_custom_call.1
$region0: #{tpu_custom_call.1}
  #allocation0 [shape = 'u32[]', space=smem, size = 0x4, offset = 0x4, fixed_abs, tag = 'smem constant byte address 0x4 - core index']
  #allocation1 [shape = 'u32[144,128]{1,0:T(1,128)}', space=vmem, size = 0x12000, scoped, tag = 'internal scratch']
  #allocation2 [shape = 'f32[1]{0:T(128)S(6)}', space=smem, size = 0x200, scoped, tag = 'scoped memory for tpu_custom_call.1']
  %s0 = inlined_call_operand.hbm [shape: f32[2,32,256], index: 0, kind: input, shape index: {}]
  %s1 = inlined_call_operand.vmem [shape: f32[32,2], index: 1, kind: input, shape index: {}]
  %s2 = inlined_call_operand.vmem [shape: f32[2], index: 2, kind: input, shape index: {}]
  %s3 = inlined_call_operand.vmem [shape: f32[32,2], index: 3, kind: input, shape index: {}]
  %s4 = inlined_call_operand.vmem [shape: f32[32,1], index: 4, kind: input, shape index: {}]
  %s5 = inlined_call_operand.hbm [shape: f32[49,2,256], index: 5, kind: input, shape index: {}]
  %s6 = inlined_call_operand.<no memory space> [shape: f32[1], index: 6, kind: input, shape index: {}]
  %s7 = inlined_call_operand.hbm [shape: f32[2,32,256], index: 7, kind: output, shape index: {}]
  %s8 = sld [smem:[#allocation0]]
  $region73: #{tpu_custom_call.1} parent=0
    _
  %s10 = ssub.s32 1, %s8
  %s11 = scalar_select 0, %s10, %s8
  %12 = sst [smem:[#allocation2]] %s6
  $region1: #{tpu_custom_call.1} parent=0
    #allocation3 [shape = 'u8[65536]{0}', space=vmem, size = 0x10000, scoped, tag = 'input window, operand 0']
    #allocation4 [shape = 's32[2]{0}', space=sflag, size = 0x8, scoped, tag = 'scoped memory for tpu_custom_call.1']
    #allocation5 [shape = 's32[2]{0}', space=sflag, size = 0x8, scoped, tag = 'scoped memory for tpu_custom_call.1']
    #allocation6 [shape = 's32[2]{0}', space=sflag, size = 0x8, scoped, tag = 'scoped memory for tpu_custom_call.1']
    #allocation7 [shape = 'u8[512]{0}', space=smem, size = 0x200, scoped, tag = 'input window, operand 2, single buffered']
    #allocation8 [shape = 'u8[100352]{0}', space=vmem, size = 0x18800, scoped, tag = 'input window, operand 5, single buffered']
    #allocation9 [shape = 's32[1]{0}', space=sflag, size = 0x4, scoped, tag = 'scoped memory for tpu_custom_call.1']
    #allocation10 [shape = 'u8[65536]{0}', space=vmem, size = 0x10000, scoped, tag = 'output window, operand 0']
    %13 = vsyncpa [#allocation4], 0
    %s14 = scalar_lea.sflag [#allocation4], 1
    %15 = vsyncpa %s14, 0
    %16 = vsyncpa [#allocation6], 0
    %17 = vsyncpa [#allocation9], 0
    %18 = vsyncpa [#allocation5], 0
    %s19 = scalar_lea.sflag [#allocation5], 1
    %20 = vsyncpa %s19, 0
    loop: start=0, step=1, limit=4
    $region2: #{tpu_custom_call.1} parent=1 // loop_pre_header
      _
    $region3: #{tpu_custom_call.1} parent=1 // loop_header
      %s22 = sphi 0, %s26
      %p23 = scmp.ge.s32.totalorder %s22, 4
      %s32 = sphi 0, %s34
      %s35 = sphi 0, %s32
      %s36 = sphi 0, %s35
      %s52 = sphi 0, %s36
      %s56 = sphi 0, %s56
      %s58 = sphi 0, %s56
      %s59 = sphi 0, %s58
      %s73 = sphi 0, %s59
      %s77 = sphi 0, %s77
      %s79 = sphi 0, %s77
      %s80 = sphi 0, %s79
      %s94 = sphi 0, %s80
      %s98 = sphi 0, %s98
      %s100 = sphi 0, %s98
      %s101 = sphi 0, %s100
      %s115 = sphi 0, %s101
      %s119 = sphi 0, %s119
      %s121 = sphi 0, %s119
      %s122 = sphi 0, %s121
      %s136 = sphi 0, %s122
      %s140 = sphi 0, %s140
      %s142 = sphi 0, %s140
      %s143 = sphi 0, %s142
      %s157 = sphi 0, %s143
      %s161 = sphi 0, %s161
      %s163 = sphi 0, %s161
      %s164 = sphi 0, %s163
      %s178 = sphi 0, %s164
      %s184 = sphi 0, %s186
      %s187 = sphi 0, %s184
      %s188 = sphi 0, %s187
      %s204 = sphi 0, %s188
    $region4: #{tpu_custom_call.1} parent=1 // loop_header_branch
      %25 = sbr.rel (%p23) target = $region8
    $region5: #{tpu_custom_call.1} parent=1 // loop_body
      %s27 = ssub.s32 %s22, 1
      %s28 = ssub.s32 %s22, 2
      %s29 = sadd.s32 %s22, 1
      %s30 = ssub.s32 %s22, %s29
      %p31 = scmp.eq.s32.totalorder %s30, 0
      %s33 = sadd.s32 %s32, 1
      %s34 = scalar_select %p31, %s32, %s33
      %p37 = pneg %p31
      %p38 = scmp.eq.s32.totalorder %s22, 1
      %p39 = por %p37, %p38
      %p40 = scmp.ne.s32.totalorder %s32, %s35
      %p41 = scmp.eq.s32.totalorder %s22, 0
      %p42 = por %p40, %p41
      %p43 = scmp.ne.s32.totalorder %s32, %s35
      %p44 = scmp.eq.s32.totalorder %s27, 1
      %p45 = por %p43, %p44
      %p46 = scmp.ne.s32.totalorder %s35, %s36
      %p47 = scmp.eq.s32.totalorder %s27, 0
      %p48 = por %p46, %p47
      %p49 = scmp.ne.s32.totalorder %s35, %s36
      %p50 = scmp.eq.s32.totalorder %s28, 1
      %p51 = por %p49, %p50
      %p53 = scmp.ne.s32.totalorder %s36, %s52
      %p54 = scmp.eq.s32.totalorder %s28, 0
      %p55 = por %p53, %p54
      %s57 = sadd.s32 %s56, 1
      %p60 = scmp.eq.s32.totalorder %s22, 1
      %p61 = scmp.ne.s32.totalorder %s56, %s58
      %p62 = scmp.eq.s32.totalorder %s22, 0
      %p63 = por %p61, %p62
      %p64 = scmp.ne.s32.totalorder %s56, %s58
      %p65 = scmp.eq.s32.totalorder %s27, 1
      %p66 = por %p64, %p65
      %p67 = scmp.ne.s32.totalorder %s58, %s59
      %p68 = scmp.eq.s32.totalorder %s27, 0
      %p69 = por %p67, %p68
      %p70 = scmp.ne.s32.totalorder %s58, %s59
      %p71 = scmp.eq.s32.totalorder %s28, 1
      %p72 = por %p70, %p71
      %p74 = scmp.ne.s32.totalorder %s59, %s73
      %p75 = scmp.eq.s32.totalorder %s28, 0
      %p76 = por %p74, %p75
      %s78 = sadd.s32 %s77, 1
      %p81 = scmp.eq.s32.totalorder %s22, 1
      %p82 = scmp.ne.s32.totalorder %s77, %s79
      %p83 = scmp.eq.s32.totalorder %s22, 0
      %p84 = por %p82, %p83
      %p85 = scmp.ne.s32.totalorder %s77, %s79
      %p86 = scmp.eq.s32.totalorder %s27, 1
      %p87 = por %p85, %p86
      %p88 = scmp.ne.s32.totalorder %s79, %s80
      %p89 = scmp.eq.s32.totalorder %s27, 0
      %p90 = por %p88, %p89
      %p91 = scmp.ne.s32.totalorder %s79, %s80
      %p92 = scmp.eq.s32.totalorder %s28, 1
      %p93 = por %p91, %p92
      %p95 = scmp.ne.s32.totalorder %s80, %s94
      %p96 = scmp.eq.s32.totalorder %s28, 0
      %p97 = por %p95, %p96
      %s99 = sadd.s32 %s98, 1
      %p102 = scmp.eq.s32.totalorder %s22, 1
      %p103 = scmp.ne.s32.totalorder %s98, %s100
      %p104 = scmp.eq.s32.totalorder %s22, 0
      %p105 = por %p103, %p104
      %p106 = scmp.ne.s32.totalorder %s98, %s100
      %p107 = scmp.eq.s32.totalorder %s27, 1
      %p108 = por %p106, %p107
      %p109 = scmp.ne.s32.totalorder %s100, %s101
      %p110 = scmp.eq.s32.totalorder %s27, 0
      %p111 = por %p109, %p110
      %p112 = scmp.ne.s32.totalorder %s100, %s101
      %p113 = scmp.eq.s32.totalorder %s28, 1
      %p114 = por %p112, %p113
      %p116 = scmp.ne.s32.totalorder %s101, %s115
      %p117 = scmp.eq.s32.totalorder %s28, 0
      %p118 = por %p116, %p117
      %s120 = sadd.s32 %s119, 1
      %p123 = scmp.eq.s32.totalorder %s22, 1
      %p124 = scmp.ne.s32.totalorder %s119, %s121
      %p125 = scmp.eq.s32.totalorder %s22, 0
      %p126 = por %p124, %p125
      %p127 = scmp.ne.s32.totalorder %s119, %s121
      %p128 = scmp.eq.s32.totalorder %s27, 1
      %p129 = por %p127, %p128
      %p130 = scmp.ne.s32.totalorder %s121, %s122
      %p131 = scmp.eq.s32.totalorder %s27, 0
      %p132 = por %p130, %p131
      %p133 = scmp.ne.s32.totalorder %s121, %s122
      %p134 = scmp.eq.s32.totalorder %s28, 1
      %p135 = por %p133, %p134
      %p137 = scmp.ne.s32.totalorder %s122, %s136
      %p138 = scmp.eq.s32.totalorder %s28, 0
      %p139 = por %p137, %p138
      %s141 = sadd.s32 %s140, 1
      %p144 = scmp.eq.s32.totalorder %s22, 1
      %p145 = scmp.ne.s32.totalorder %s140, %s142
      %p146 = scmp.eq.s32.totalorder %s22, 0
      %p147 = por %p145, %p146
      %p148 = scmp.ne.s32.totalorder %s140, %s142
      %p149 = scmp.eq.s32.totalorder %s27, 1
      %p150 = por %p148, %p149
      %p151 = scmp.ne.s32.totalorder %s142, %s143
      %p152 = scmp.eq.s32.totalorder %s27, 0
      %p153 = por %p151, %p152
      %p154 = scmp.ne.s32.totalorder %s142, %s143
      %p155 = scmp.eq.s32.totalorder %s28, 1
      %p156 = por %p154, %p155
      %p158 = scmp.ne.s32.totalorder %s143, %s157
      %p159 = scmp.eq.s32.totalorder %s28, 0
      %p160 = por %p158, %p159
      %s162 = sadd.s32 %s161, 1
      %p165 = scmp.eq.s32.totalorder %s22, 1
      %p166 = scmp.ne.s32.totalorder %s161, %s163
      %p167 = scmp.eq.s32.totalorder %s22, 0
      %p168 = por %p166, %p167
      %p169 = scmp.ne.s32.totalorder %s161, %s163
      %p170 = scmp.eq.s32.totalorder %s27, 1
      %p171 = por %p169, %p170
      %p172 = scmp.ne.s32.totalorder %s163, %s164
      %p173 = scmp.eq.s32.totalorder %s27, 0
      %p174 = por %p172, %p173
      %p175 = scmp.ne.s32.totalorder %s163, %s164
      %p176 = scmp.eq.s32.totalorder %s28, 1
      %p177 = por %p175, %p176
      %p179 = scmp.ne.s32.totalorder %s164, %s178
      %p180 = scmp.eq.s32.totalorder %s28, 0
      %p181 = por %p179, %p180
      %s182 = ssub.s32 %s22, %s29
      %p183 = scmp.eq.s32.totalorder %s182, 0
      %s185 = sadd.s32 %s184, 1
      %s186 = scalar_select %p183, %s184, %s185
      %p189 = pneg %p183
      %p190 = scmp.eq.s32.totalorder %s22, 1
      %p191 = por %p189, %p190
      %p192 = scmp.ne.s32.totalorder %s184, %s187
      %p193 = scmp.eq.s32.totalorder %s22, 0
      %p194 = por %p192, %p193
      %p195 = scmp.ne.s32.totalorder %s184, %s187
      %p196 = scmp.eq.s32.totalorder %s27, 1
      %p197 = por %p195, %p196
      %p198 = scmp.ne.s32.totalorder %s187, %s188
      %p199 = scmp.eq.s32.totalorder %s27, 0
      %p200 = por %p198, %p199
      %p201 = scmp.ne.s32.totalorder %s187, %s188
      %p202 = scmp.eq.s32.totalorder %s28, 1
      %p203 = por %p201, %p202
      %p205 = scmp.ne.s32.totalorder %s188, %s204
      %p206 = scmp.eq.s32.totalorder %s28, 0
      %p207 = por %p205, %p206
      %p208 = scmp.le.s32.totalorder 1, %s22
      %p209 = scmp.lt.s32.totalorder %s22, 3
      %p210 = pnand %p208, %p209
      %p211 = pneg %p210
      // Predicated region
      $region9: #{tpu_custom_call.1} parent=5 // pred_check
        _
      $region10: #{tpu_custom_call.1} parent=5 // pred_check_branch
        %213 = sbr.rel (%p210) target = $region12
      $region11: #{tpu_custom_call.1} parent=5 // pred_region
        %s214 = ssub.s32 %s22, 1
        // Predicated region
        $region13: #{tpu_custom_call.1} parent=11 // pred_check
          %p215 = pneg %p69
        $region14: #{tpu_custom_call.1} parent=11 // pred_check_branch
          %217 = sbr.rel (%p215) target = $region16
        $region15: #{tpu_custom_call.1} parent=11 // pred_region
          _
        $region16: #{tpu_custom_call.1} parent=11 // pred_fallthru
          _
        // Predicated region
        $region17: #{tpu_custom_call.1} parent=11 // pred_check
          %p218 = pneg %p90
        $region18: #{tpu_custom_call.1} parent=11 // pred_check_branch
          %220 = sbr.rel (%p218) target = $region20
        $region19: #{tpu_custom_call.1} parent=11 // pred_region
          %s222 = ssub.s32 16, 16
          %223 = vsyncadd [#allocation6], %s222
          %s225 = sshll.u32 %s2, 4
          %s226 = int_to_ptr.vmem [resolvable:$true] %s225
          %228 = dma.vmem_to_smem %s226, 16, [#allocation7], [#allocation6]
        $region20: #{tpu_custom_call.1} parent=11 // pred_fallthru
          _
        // Predicated region
        $region21: #{tpu_custom_call.1} parent=11 // pred_check
          %p229 = pneg %p111
        $region22: #{tpu_custom_call.1} parent=11 // pred_check_branch
          %231 = sbr.rel (%p229) target = $region24
        $region23: #{tpu_custom_call.1} parent=11 // pred_region
          _
        $region24: #{tpu_custom_call.1} parent=11 // pred_fallthru
          _
        // Predicated region
        $region25: #{tpu_custom_call.1} parent=11 // pred_check
          %p232 = pneg %p132
        $region26: #{tpu_custom_call.1} parent=11 // pred_check_branch
          %234 = sbr.rel (%p232) target = $region28
        $region27: #{tpu_custom_call.1} parent=11 // pred_region
          _
        $region28: #{tpu_custom_call.1} parent=11 // pred_fallthru
          _
        // Predicated region
        $region29: #{tpu_custom_call.1} parent=11 // pred_check
          %p235 = pneg %p153
        $region30: #{tpu_custom_call.1} parent=11 // pred_check_branch
          %237 = sbr.rel (%p235) target = $region32
        $region31: #{tpu_custom_call.1} parent=11 // pred_region
          %s239 = ssub.s32 3136, 3136
          %240 = vsyncadd [#allocation9], %s239
          %s241 = sshll.u32 [#allocation8], 4
          %s242 = int_to_ptr.vmem [resolvable:$true] %s241
          %247 = dma.hbm_to_vmem [thread:$0]  %s5, 3136, %s242, [#allocation9], 64, 64, 4
        $region32: #{tpu_custom_call.1} parent=11 // pred_fallthru
          _
        // Predicated region
        $region33: #{tpu_custom_call.1} parent=11 // pred_check
          %p248 = pneg %p174
        $region34: #{tpu_custom_call.1} parent=11 // pred_check_branch
          %250 = sbr.rel (%p248) target = $region36
        $region35: #{tpu_custom_call.1} parent=11 // pred_region
          _
        $region36: #{tpu_custom_call.1} parent=11 // pred_fallthru
          _
      $region12: #{tpu_custom_call.1} parent=5 // pred_fallthru
        _
      %p251 = scmp.lt.s32.totalorder %s22, 2
      // Predicated region
      $region37: #{tpu_custom_call.1} parent=5 // pred_check
        %p252 = pneg %p251
      $region38: #{tpu_custom_call.1} parent=5 // pred_check_branch
        %254 = sbr.rel (%p252) target = $region40
      $region39: #{tpu_custom_call.1} parent=5 // pred_region
        // Predicated region
        $region41: #{tpu_custom_call.1} parent=39 // pred_check
          %p255 = pneg %p42
        $region42: #{tpu_custom_call.1} parent=39 // pred_check_branch
          %257 = sbr.rel (%p255) target = $region44
        $region43: #{tpu_custom_call.1} parent=39 // pred_region
          %s258 = sand.u32 %s32, 1
          %s259 = scalar_lea.sflag [#allocation4], %s258
          %s260 = sand.u32 %s32, 1
          %s261 = smul.addr %s260, 64
          %s262 = scalar_lea.vmem [#allocation3], %s261
          %s264 = ssub.s32 1024, 1024
          %265 = vsyncadd %s259, %s264
          %s266 = smul.addr %s22, 8
          %s267 = smul.addr %s266, 128
          %s268 = scalar_lea.hbm %s0, %s267
          %s269 = sshll.u32 %s262, 4
          %s270 = int_to_ptr.vmem [resolvable:$true] %s269
          %275 = dma.hbm_to_vmem [thread:$0]  %s268, 1024, %s270, %s259, 256, 256, 16
        $region44: #{tpu_custom_call.1} parent=39 // pred_fallthru
          _
      $region40: #{tpu_custom_call.1} parent=5 // pred_fallthru
        _
      %p276 = scmp.le.s32.totalorder 1, %s22
      %p277 = scmp.lt.s32.totalorder %s22, 3
      %p278 = pnand %p276, %p277
      %p279 = pneg %p278
      // Predicated region
      $region45: #{tpu_custom_call.1} parent=5 // pred_check
        _
      $region46: #{tpu_custom_call.1} parent=5 // pred_check_branch
        %281 = sbr.rel (%p278) target = $region48
      $region47: #{tpu_custom_call.1} parent=5 // pred_region
        %s282 = ssub.s32 %s22, 1
        %s283 = sand.u32 %s35, 1
        %s284 = scalar_lea.sflag [#allocation4], %s283
        %s285 = sand.u32 %s35, 1
        %s286 = smul.addr %s285, 64
        %s287 = scalar_lea.vmem [#allocation3], %s286
        // Predicated region
        $region49: #{tpu_custom_call.1} parent=47 // pred_check
          %p288 = pneg %p48
        $region50: #{tpu_custom_call.1} parent=47 // pred_check_branch
          %290 = sbr.rel (%p288) target = $region52
        $region51: #{tpu_custom_call.1} parent=47 // pred_region
          %291 = dma.done %s284, 1024
        $region52: #{tpu_custom_call.1} parent=47 // pred_fallthru
          _
        // Predicated region
        $region53: #{tpu_custom_call.1} parent=47 // pred_check
          %p292 = pneg %p90
        $region54: #{tpu_custom_call.1} parent=47 // pred_check_branch
          %294 = sbr.rel (%p292) target = $region56
        $region55: #{tpu_custom_call.1} parent=47 // pred_region
          %295 = dma.done [#allocation6], 16
        $region56: #{tpu_custom_call.1} parent=47 // pred_fallthru
          _
        // Predicated region
        $region57: #{tpu_custom_call.1} parent=47 // pred_check
          %p296 = pneg %p153
        $region58: #{tpu_custom_call.1} parent=47 // pred_check_branch
          %298 = sbr.rel (%p296) target = $region60
        $region59: #{tpu_custom_call.1} parent=47 // pred_region
          %299 = dma.done [#allocation9], 3136
        $region60: #{tpu_custom_call.1} parent=47 // pred_fallthru
          _
        %300 = sfence
        %s301 = sand.u32 %s35, 1
        %s302 = scalar_lea.sflag [#allocation4], %s301
        %s303 = sand.u32 %s35, 1
        %s304 = smul.addr %s303, 64
        %s305 = scalar_lea.vmem [#allocation3], %s304
        %p306 = pneg %p48
        %p307 = pneg %p45
        %p308 = pneg %p69
        %p309 = pneg %p66
        %p310 = pneg %p90
        %p311 = pneg %p87
        %p312 = pneg %p111
        %p313 = pneg %p108
        %p314 = pneg %p132
        %p315 = pneg %p129
        %p316 = pneg %p153
        %p317 = pneg %p150
        %p318 = pneg %p174
        %p319 = pneg %p171
        %p320 = pneg %p200
        %p321 = pneg %p197
        %s322 = sand.u32 %s187, 1
        %s323 = scalar_lea.sflag [#allocation5], %s322
        %s324 = sand.u32 %s187, 1
        %s325 = smul.addr %s324, 64
        %s326 = scalar_lea.vmem [#allocation10], %s325
        %v327 = vld [vmem:[%s287] sm:$0xff]
        %v328 = vld [vmem:[%s287 + $0x8] sm:$0xff]
        %v329 = vld [vmem:[%s287 + $0x10] sm:$0xff]
        %v330 = vld [vmem:[%s287 + $0x18] sm:$0xff]
        %v331 = vld [vmem:[%s287 + $0x20] sm:$0xff]
        %v332 = vld [vmem:[%s287 + $0x28] sm:$0xff]
        %v333 = vld [vmem:[%s287 + $0x30] sm:$0xff]
        %v334 = vld [vmem:[%s287 + $0x38] sm:$0xff]
        %v335 = vadd.f32 %v327, %v328
        %336 = vadd.xlane.f32.xlu0 %v335
        %v337 = vpop.xlane.xlu0 %336
        %v338 = vadd.f32 %v329, %v330
        %339 = vadd.xlane.f32.xlu0 %v338
        %v340 = vpop.xlane.xlu0 %339
        %v341 = vadd.f32 %v331, %v332
        %342 = vadd.xlane.f32.xlu0 %v341
        %v343 = vpop.xlane.xlu0 %342
        %v344 = vadd.f32 %v333, %v334
        %345 = vadd.xlane.f32.xlu0 %v344
        %v346 = vpop.xlane.xlu0 %345
        %v347 = vrcp.pop 256.0
        %v348 = vmul.f32 %v337, %v347
        %v349 = vmul.f32 %v340, %v347
        %v350 = vmul.f32 %v343, %v347
        %v351 = vmul.f32 %v346, %v347
        %v352 = vmax.f32 %v327, %v328
        %353 = vmax.xlane.f32.xlu0 %v352
        %v354 = vpop.xlane.xlu0 %353
        %v355 = vmax.f32 %v329, %v330
        %356 = vmax.xlane.f32.xlu0 %v355
        %v357 = vpop.xlane.xlu0 %356
        %v358 = vmax.f32 %v331, %v332
        %359 = vmax.xlane.f32.xlu0 %v358
        %v360 = vpop.xlane.xlu0 %359
        %v361 = vmax.f32 %v333, %v334
        %362 = vmax.xlane.f32.xlu0 %v361
        %v363 = vpop.xlane.xlu0 %362
        %vm364 = vcmask 7168
        %v365 = vsel %vm364, %v348, %v354
        %v366 = vsel %vm364, %v349, %v357
        %v367 = vsel %vm364, %v350, %v360
        %v368 = vsel %vm364, %v351, %v363
        %v369 = vld [vmem:[%s4] sm:$0xff]
        %v370 = vld [vmem:[%s4 + $0x8] sm:$0xff]
        %v371 = vld [vmem:[%s4 + $0x10] sm:$0xff]
        %v372 = vld [vmem:[%s4 + $0x18] sm:$0xff]
        %v373 = vld [vmem:[%s1] sm:$0xff]
        %v374 = vld [vmem:[%s1 + $0x8] sm:$0xff]
        %v375 = vld [vmem:[%s1 + $0x10] sm:$0xff]
        %v376 = vld [vmem:[%s1 + $0x18] sm:$0xff]
        %378 = vset.pattern.permute.xlu0 0
        %379 = vperm.xlu0 %378, %v373
        %v380 = vpop.permute.xlu0 %379
        %383 = vset.pattern.permute.xlu0 0
        %384 = vperm.xlu0 %383, %v374
        %v385 = vpop.permute.xlu0 %384
        %388 = vset.pattern.permute.xlu0 0
        %389 = vperm.xlu0 %388, %v375
        %v390 = vpop.permute.xlu0 %389
        %393 = vset.pattern.permute.xlu0 0
        %394 = vperm.xlu0 %393, %v376
        %v395 = vpop.permute.xlu0 %394
        %v397 = vmul.f32 %v380, %v365
        %v398 = vmul.f32 %v385, %v366
        %v399 = vmul.f32 %v390, %v367
        %v400 = vmul.f32 %v395, %v368
        %vm401 = vcmask 15360
        %v402 = vsel %vm401, %v397, 0.0
        %v403 = vsel %vm401, %v398, 0.0
        %v404 = vadd.f32 %v402, %v403
        %v405 = vsel %vm401, %v399, 0.0
        %v406 = vadd.f32 %v404, %v405
        %v407 = vsel %vm401, %v400, 0.0
        %v408 = vadd.f32 %v406, %v407
        %v409 = vrot.slane %v408, 4
        %v410 = vadd.f32 %v408, %v409
        %v411 = vrot.slane %v410, 2
        %v412 = vadd.f32 %v410, %v411
        %v413 = vrot.slane %v412, 1
        %v414 = vadd.f32 %v412, %v413
        %s415 = sld [smem:[#allocation7]]
        %v416 = vstv %s415
        %v417 = vadd.f32 %v414, %v416
        %v418 = vmax.f32 %v417, 0.0
        %v419 = vld [vmem:[%s3] sm:$0xff]
        %v420 = vld [vmem:[%s3 + $0x8] sm:$0xff]
        %v421 = vld [vmem:[%s3 + $0x10] sm:$0xff]
        %v422 = vld [vmem:[%s3 + $0x18] sm:$0xff]
        %424 = vset.pattern.permute.xlu0 0
        %425 = vperm.xlu0 %424, %v419
        %v426 = vpop.permute.xlu0 %425
        %429 = vset.pattern.permute.xlu0 0
        %430 = vperm.xlu0 %429, %v420
        %v431 = vpop.permute.xlu0 %430
        %434 = vset.pattern.permute.xlu0 0
        %435 = vperm.xlu0 %434, %v421
        %v436 = vpop.permute.xlu0 %435
        %439 = vset.pattern.permute.xlu0 0
        %440 = vperm.xlu0 %439, %v422
        %v441 = vpop.permute.xlu0 %440
        %v443 = vmul.f32 %v426, %v418
        %v444 = vmul.f32 %v431, %v418
        %v445 = vmul.f32 %v436, %v418
        %v446 = vmul.f32 %v441, %v418
        %448 = vset.pattern.permute.xlu0 0
        %449 = vperm.xlu0 %448, %v369
        %v450 = vpop.permute.xlu0 %449
        %453 = vset.pattern.permute.xlu0 0
        %454 = vperm.xlu0 %453, %v370
        %v455 = vpop.permute.xlu0 %454
        %458 = vset.pattern.permute.xlu0 0
        %459 = vperm.xlu0 %458, %v371
        %v460 = vpop.permute.xlu0 %459
        %463 = vset.pattern.permute.xlu0 0
        %464 = vperm.xlu0 %463, %v372
        %v465 = vpop.permute.xlu0 %464
        %v467 = vadd.f32 %v450, %v443
        %v468 = vadd.f32 %v455, %v444
        %v469 = vadd.f32 %v460, %v445
        %v470 = vadd.f32 %v465, %v446
        %471 = vset.pattern.permute.xlu0 1
        %472 = vperm.xlu0 %471, %v373
        %v473 = vpop.permute.xlu0 %472
        %475 = vset.pattern.permute.xlu0 1
        %476 = vperm.xlu0 %475, %v374
        %v477 = vpop.permute.xlu0 %476
        %479 = vset.pattern.permute.xlu0 1
        %480 = vperm.xlu0 %479, %v375
        %v481 = vpop.permute.xlu0 %480
        %483 = vset.pattern.permute.xlu0 1
        %484 = vperm.xlu0 %483, %v376
        %v485 = vpop.permute.xlu0 %484
        %v487 = vmul.f32 %v473, %v365
        %v488 = vmul.f32 %v477, %v366
        %v489 = vmul.f32 %v481, %v367
        %v490 = vmul.f32 %v485, %v368
        %v491 = vsel %vm401, %v487, 0.0
        %v492 = vsel %vm401, %v488, 0.0
        %v493 = vadd.f32 %v491, %v492
        %v494 = vsel %vm401, %v489, 0.0
        %v495 = vadd.f32 %v493, %v494
        %v496 = vsel %vm401, %v490, 0.0
        %v497 = vadd.f32 %v495, %v496
        %v498 = vrot.slane %v497, 4
        %v499 = vadd.f32 %v497, %v498
        %v500 = vrot.slane %v499, 2
        %v501 = vadd.f32 %v499, %v500
        %v502 = vrot.slane %v501, 1
        %v503 = vadd.f32 %v501, %v502
        %s504 = sld [smem:[#allocation7 + $0x1]]
        %v505 = vstv %s504
        %v506 = vadd.f32 %v503, %v505
        %v507 = vmax.f32 %v506, 0.0
        %508 = vset.pattern.permute.xlu0 1
        %509 = vperm.xlu0 %508, %v419
        %v510 = vpop.permute.xlu0 %509
        %512 = vset.pattern.permute.xlu0 1
        %513 = vperm.xlu0 %512, %v420
        %v514 = vpop.permute.xlu0 %513
        %516 = vset.pattern.permute.xlu0 1
        %517 = vperm.xlu0 %516, %v421
        %v518 = vpop.permute.xlu0 %517
        %520 = vset.pattern.permute.xlu0 1
        %521 = vperm.xlu0 %520, %v422
        %v522 = vpop.permute.xlu0 %521
        %v524 = vmul.f32 %v510, %v507
        %v525 = vmul.f32 %v514, %v507
        %v526 = vmul.f32 %v518, %v507
        %v527 = vmul.f32 %v522, %v507
        %v528 = vadd.f32 %v467, %v524
        %v529 = vadd.f32 %v468, %v525
        %v530 = vadd.f32 %v469, %v526
        %v531 = vadd.f32 %v470, %v527
        %536 = vrot.lane.b32.xlu0 %v528, 127
        %v537 = vpop.permute.xlu0 %536
        %538 = vrot.lane.b32.xlu0 %v529, 127
        %v539 = vpop.permute.xlu0 %538
        %540 = vrot.lane.b32.xlu0 %v530, 127
        %v541 = vpop.permute.xlu0 %540
        %542 = vrot.lane.b32.xlu0 %v531, 127
        %v543 = vpop.permute.xlu0 %542
        %v548 = vadd.f32 %v528, %v537
        %v549 = vadd.f32 %v529, %v539
        %v550 = vadd.f32 %v530, %v541
        %v551 = vadd.f32 %v531, %v543
        %v552 = vsub.f32 0.0, %v548
        %v553 = vsub.f32 0.0, %v549
        %v554 = vsub.f32 0.0, %v550
        %v555 = vsub.f32 0.0, %v551
        %v556 = vmul.f32 %v552, 1.442695
        %v557 = vpow.pop %v556
        %v558 = vmul.f32 %v553, 1.442695
        %v559 = vpow.pop %v558
        %v560 = vmul.f32 %v554, 1.442695
        %v561 = vpow.pop %v560
        %v562 = vmul.f32 %v555, 1.442695
        %v563 = vpow.pop %v562
        %v564 = vadd.f32 %v557, 1.0
        %v565 = vadd.f32 %v559, 1.0
        %v566 = vadd.f32 %v561, 1.0
        %v567 = vadd.f32 %v563, 1.0
        %v568 = vrcp.pop %v564
        %v569 = vrcp.pop %v565
        %v570 = vrcp.pop %v566
        %v571 = vrcp.pop %v567
        %573 = vset.pattern.permute.xlu0 0
        %574 = vperm.xlu0 %573, %v568
        %v575 = vpop.permute.xlu0 %574
        %578 = vset.pattern.permute.xlu0 0
        %579 = vperm.xlu0 %578, %v569
        %v580 = vpop.permute.xlu0 %579
        %583 = vset.pattern.permute.xlu0 0
        %584 = vperm.xlu0 %583, %v570
        %v585 = vpop.permute.xlu0 %584
        %588 = vset.pattern.permute.xlu0 0
        %589 = vperm.xlu0 %588, %v571
        %v590 = vpop.permute.xlu0 %589
        %v592 = vmul.f32 %v327, %v575
        %v593 = vmul.f32 %v328, %v575
        %v594 = vmul.f32 %v329, %v580
        %v595 = vmul.f32 %v330, %v580
        %v596 = vmul.f32 %v331, %v585
        %v597 = vmul.f32 %v332, %v585
        %v598 = vmul.f32 %v333, %v590
        %v599 = vmul.f32 %v334, %v590
        %v600 = vadd.f32 %v592, %v594
        %v601 = vadd.f32 %v600, %v596
        %v602 = vadd.f32 %v601, %v598
        %v603 = vrot.slane %v602, 4
        %v604 = vadd.f32 %v602, %v603
        %v605 = vrot.slane %v604, 2
        %v606 = vadd.f32 %v604, %v605
        %v607 = vrot.slane %v606, 1
        %v608 = vadd.f32 %v606, %v607
        %v609 = vadd.f32 %v593, %v595
        %v610 = vadd.f32 %v609, %v597
        %v611 = vadd.f32 %v610, %v599
        %v612 = vrot.slane %v611, 4
        %v613 = vadd.f32 %v611, %v612
        %v614 = vrot.slane %v613, 2
        %v615 = vadd.f32 %v613, %v614
        %v616 = vrot.slane %v615, 1
        %v617 = vadd.f32 %v615, %v616
        %v618 = vrcp.pop 32.0
        %v619 = vmul.f32 %v608, %v618
        %v620 = vmul.f32 %v617, %v618
        %v621 = vmax.f32 %v592, %v596
        %v622 = vmax.f32 %v594, %v598
        %v623 = vmax.f32 %v621, %v622
        %v624 = vrot.slane %v623, 4
        %v625 = vmax.f32 %v623, %v624
        %v626 = vrot.slane %v625, 2
        %v627 = vmax.f32 %v625, %v626
        %v628 = vrot.slane %v627, 1
        %v629 = vmax.f32 %v627, %v628
        %v630 = vmax.f32 %v593, %v597
        %v631 = vmax.f32 %v595, %v599
        %v632 = vmax.f32 %v630, %v631
        %v633 = vrot.slane %v632, 4
        %v634 = vmax.f32 %v632, %v633
        %v635 = vrot.slane %v634, 2
        %v636 = vmax.f32 %v634, %v635
        %v637 = vrot.slane %v636, 1
        %v638 = vmax.f32 %v636, %v637
        %vm639 = vcmask 1040384
        %v640 = vsel %vm639, %v619, %v629
        %v641 = vsel %vm639, %v620, %v638
        %642 = vrot.lane.b32.xlu0 %v640, 51
        %v643 = vpop.permute.xlu0 %642
        %644 = vrot.lane.b32.xlu0 %v641, 51
        %v645 = vpop.permute.xlu0 %644
        %v646 = vlaneseq
        %v647 = vand.u32 %v646, 127
        %vm648 = vcmp.lt.s32.totalorder %v647, 51
        %v649 = vsel %vm648, %v643, %v645
        %v650 = vsel %vm648, %v645, %v643
        %v651 = vld [vmem:[#allocation8] sm:$0xf]
        %v654 = vunpack.c.l.s4 1983009808
        %v655 = vunpack.c.0.s8 %v654
        %v656 = vlaneseq
        %v657 = vshrl.u32 %v656, 7
        %v658 = vsub.s32 %v655, %v657
        %v659 = vrot.slane %v651, %v658
        %v660 = vcombine.high %v659, %v659
        %v663 = vmul.f32 %v650, %v659
        %v664 = vmul.f32 %v649, %v660
        %v665 = vadd.f32 %v663, 0.0
        %v666 = vadd.f32 %v664, 0.0
        %667 = vrot.lane.b32.xlu0 %v640, 50
        %v668 = vpop.permute.xlu0 %667
        %669 = vrot.lane.b32.xlu0 %v641, 50
        %v670 = vpop.permute.xlu0 %669
        %vm671 = vcmp.lt.s32.totalorder %v647, 50
        %v672 = vsel %vm671, %v668, %v670
        %v673 = vsel %vm671, %v670, %v668
        %s674 = scalar_lea.vmem [#allocation8], 4
        %v675 = vld [vmem:[%s674] sm:$0xf]
        %v678 = vunpack.c.l.s4 1983009808
        %v679 = vunpack.c.0.s8 %v678
        %v680 = vlaneseq
        %v681 = vshrl.u32 %v680, 7
        %v682 = vsub.s32 %v679, %v681
        %v683 = vrot.slane %v675, %v682
        %v684 = vcombine.high %v683, %v683
        %v687 = vmul.f32 %v673, %v683
        %v688 = vmul.f32 %v672, %v684
        %v689 = vadd.f32 %v687, 0.0
        %v690 = vadd.f32 %v688, 0.0
        %691 = vrot.lane.b32.xlu0 %v640, 49
        %v692 = vpop.permute.xlu0 %691
        %693 = vrot.lane.b32.xlu0 %v641, 49
        %v694 = vpop.permute.xlu0 %693
        %vm695 = vcmp.lt.s32.totalorder %v647, 49
        %v696 = vsel %vm695, %v692, %v694
        %v697 = vsel %vm695, %v694, %v692
        %s698 = scalar_lea.vmem [#allocation8], 8
        %v699 = vld [vmem:[%s698] sm:$0xf]
        %v702 = vunpack.c.l.s4 1983009808
        %v703 = vunpack.c.0.s8 %v702
        %v704 = vlaneseq
        %v705 = vshrl.u32 %v704, 7
        %v706 = vsub.s32 %v703, %v705
        %v707 = vrot.slane %v699, %v706
        %v708 = vcombine.high %v707, %v707
        %v711 = vmul.f32 %v697, %v707
        %v712 = vmul.f32 %v696, %v708
        %v713 = vadd.f32 %v711, 0.0
        %v714 = vadd.f32 %v712, 0.0
        %715 = vrot.lane.b32.xlu0 %v640, 48
        %v716 = vpop.permute.xlu0 %715
        %717 = vrot.lane.b32.xlu0 %v641, 48
        %v718 = vpop.permute.xlu0 %717
        %vm719 = vcmp.lt.s32.totalorder %v647, 48
        %v720 = vsel %vm719, %v716, %v718
        %v721 = vsel %vm719, %v718, %v716
        %s722 = scalar_lea.vmem [#allocation8], 12
        %v723 = vld [vmem:[%s722] sm:$0xf]
        %v726 = vunpack.c.l.s4 1983009808
        %v727 = vunpack.c.0.s8 %v726
        %v728 = vlaneseq
        %v729 = vshrl.u32 %v728, 7
        %v730 = vsub.s32 %v727, %v729
        %v731 = vrot.slane %v723, %v730
        %v732 = vcombine.high %v731, %v731
        %v735 = vmul.f32 %v721, %v731
        %v736 = vmul.f32 %v720, %v732
        %v737 = vadd.f32 %v735, 0.0
        %v738 = vadd.f32 %v736, 0.0
        %739 = vrot.lane.b32.xlu0 %v640, 47
        %v740 = vpop.permute.xlu0 %739
        %741 = vrot.lane.b32.xlu0 %v641, 47
        %v742 = vpop.permute.xlu0 %741
        %vm743 = vcmp.lt.s32.totalorder %v647, 47
        %v744 = vsel %vm743, %v740, %v742
        %v745 = vsel %vm743, %v742, %v740
        %s746 = scalar_lea.vmem [#allocation8], 16
        %v747 = vld [vmem:[%s746] sm:$0xf]
        %v750 = vunpack.c.l.s4 1983009808
        %v751 = vunpack.c.0.s8 %v750
        %v752 = vlaneseq
        %v753 = vshrl.u32 %v752, 7
        %v754 = vsub.s32 %v751, %v753
        %v755 = vrot.slane %v747, %v754
        %v756 = vcombine.high %v755, %v755
        %v759 = vmul.f32 %v745, %v755
        %v760 = vmul.f32 %v744, %v756
        %v761 = vadd.f32 %v665, %v759
        %v762 = vadd.f32 %v666, %v760
        %763 = vrot.lane.b32.xlu0 %v640, 46
        %v764 = vpop.permute.xlu0 %763
        %765 = vrot.lane.b32.xlu0 %v641, 46
        %v766 = vpop.permute.xlu0 %765
        %vm767 = vcmp.lt.s32.totalorder %v647, 46
        %v768 = vsel %vm767, %v764, %v766
        %v769 = vsel %vm767, %v766, %v764
        %s770 = scalar_lea.vmem [#allocation8], 20
        %v771 = vld [vmem:[%s770] sm:$0xf]
        %v774 = vunpack.c.l.s4 1983009808
        %v775 = vunpack.c.0.s8 %v774
        %v776 = vlaneseq
        %v777 = vshrl.u32 %v776, 7
        %v778 = vsub.s32 %v775, %v777
        %v779 = vrot.slane %v771, %v778
        %v780 = vcombine.high %v779, %v779
        %v783 = vmul.f32 %v769, %v779
        %v784 = vmul.f32 %v768, %v780
        %v785 = vadd.f32 %v689, %v783
        %v786 = vadd.f32 %v690, %v784
        %787 = vrot.lane.b32.xlu0 %v640, 45
        %v788 = vpop.permute.xlu0 %787
        %789 = vrot.lane.b32.xlu0 %v641, 45
        %v790 = vpop.permute.xlu0 %789
        %vm791 = vcmp.lt.s32.totalorder %v647, 45
        %v792 = vsel %vm791, %v788, %v790
        %v793 = vsel %vm791, %v790, %v788
        %s794 = scalar_lea.vmem [#allocation8], 24
        %v795 = vld [vmem:[%s794] sm:$0xf]
        %v798 = vunpack.c.l.s4 1983009808
        %v799 = vunpack.c.0.s8 %v798
        %v800 = vlaneseq
        %v801 = vshrl.u32 %v800, 7
        %v802 = vsub.s32 %v799, %v801
        %v803 = vrot.slane %v795, %v802
        %v804 = vcombine.high %v803, %v803
        %v807 = vmul.f32 %v793, %v803
        %v808 = vmul.f32 %v792, %v804
        %v809 = vadd.f32 %v713, %v807
        %v810 = vadd.f32 %v714, %v808
        %811 = vrot.lane.b32.xlu0 %v640, 35
        %v812 = vpop.permute.xlu0 %811
        %813 = vrot.lane.b32.xlu0 %v641, 35
        %v814 = vpop.permute.xlu0 %813
        %vm815 = vcmp.lt.s32.totalorder %v647, 35
        %v816 = vsel %vm815, %v812, %v814
        %v817 = vsel %vm815, %v814, %v812
        %s818 = scalar_lea.vmem [#allocation8], 28
        %v819 = vld [vmem:[%s818] sm:$0xf]
        %v822 = vunpack.c.l.s4 1983009808
        %v823 = vunpack.c.0.s8 %v822
        %v824 = vlaneseq
        %v825 = vshrl.u32 %v824, 7
        %v826 = vsub.s32 %v823, %v825
        %v827 = vrot.slane %v819, %v826
        %v828 = vcombine.high %v827, %v827
        %v831 = vmul.f32 %v817, %v827
        %v832 = vmul.f32 %v816, %v828
        %v833 = vadd.f32 %v737, %v831
        %v834 = vadd.f32 %v738, %v832
        %835 = vrot.lane.b32.xlu0 %v640, 34
        %v836 = vpop.permute.xlu0 %835
        %837 = vrot.lane.b32.xlu0 %v641, 34
        %v838 = vpop.permute.xlu0 %837
        %vm839 = vcmp.lt.s32.totalorder %v647, 34
        %v840 = vsel %vm839, %v836, %v838
        %v841 = vsel %vm839, %v838, %v836
        %s842 = scalar_lea.vmem [#allocation8], 32
        %v843 = vld [vmem:[%s842] sm:$0xf]
        %v846 = vunpack.c.l.s4 1983009808
        %v847 = vunpack.c.0.s8 %v846
        %v848 = vlaneseq
        %v849 = vshrl.u32 %v848, 7
        %v850 = vsub.s32 %v847, %v849
        %v851 = vrot.slane %v843, %v850
        %v852 = vcombine.high %v851, %v851
        %v855 = vmul.f32 %v841, %v851
        %v856 = vmul.f32 %v840, %v852
        %v857 = vadd.f32 %v761, %v855
        %v858 = vadd.f32 %v762, %v856
        %859 = vrot.lane.b32.xlu0 %v640, 33
        %v860 = vpop.permute.xlu0 %859
        %861 = vrot.lane.b32.xlu0 %v641, 33
        %v862 = vpop.permute.xlu0 %861
        %vm863 = vcmp.lt.s32.totalorder %v647, 33
        %v864 = vsel %vm863, %v860, %v862
        %v865 = vsel %vm863, %v862, %v860
        %s866 = scalar_lea.vmem [#allocation8], 36
        %v867 = vld [vmem:[%s866] sm:$0xf]
        %v870 = vunpack.c.l.s4 1983009808
        %v871 = vunpack.c.0.s8 %v870
        %v872 = vlaneseq
        %v873 = vshrl.u32 %v872, 7
        %v874 = vsub.s32 %v871, %v873
        %v875 = vrot.slane %v867, %v874
        %v876 = vcombine.high %v875, %v875
        %v879 = vmul.f32 %v865, %v875
        %v880 = vmul.f32 %v864, %v876
        %v881 = vadd.f32 %v785, %v879
        %v882 = vadd.f32 %v786, %v880
        %883 = vrot.lane.b32.xlu0 %v640, 32
        %v884 = vpop.permute.xlu0 %883
        %885 = vrot.lane.b32.xlu0 %v641, 32
        %v886 = vpop.permute.xlu0 %885
        %vm887 = vcmp.lt.s32.totalorder %v647, 32
        %v888 = vsel %vm887, %v884, %v886
        %v889 = vsel %vm887, %v886, %v884
        %s890 = scalar_lea.vmem [#allocation8], 40
        %v891 = vld [vmem:[%s890] sm:$0xf]
        %v894 = vunpack.c.l.s4 1983009808
        %v895 = vunpack.c.0.s8 %v894
        %v896 = vlaneseq
        %v897 = vshrl.u32 %v896, 7
        %v898 = vsub.s32 %v895, %v897
        %v899 = vrot.slane %v891, %v898
        %v900 = vcombine.high %v899, %v899
        %v903 = vmul.f32 %v889, %v899
        %v904 = vmul.f32 %v888, %v900
        %v905 = vadd.f32 %v809, %v903
        %v906 = vadd.f32 %v810, %v904
        %907 = vrot.lane.b32.xlu0 %v640, 31
        %v908 = vpop.permute.xlu0 %907
        %909 = vrot.lane.b32.xlu0 %v641, 31
        %v910 = vpop.permute.xlu0 %909
        %vm911 = vcmp.lt.s32.totalorder %v647, 31
        %v912 = vsel %vm911, %v908, %v910
        %v913 = vsel %vm911, %v910, %v908
        %s914 = scalar_lea.vmem [#allocation8], 44
        %v915 = vld [vmem:[%s914] sm:$0xf]
        %v918 = vunpack.c.l.s4 1983009808
        %v919 = vunpack.c.0.s8 %v918
        %v920 = vlaneseq
        %v921 = vshrl.u32 %v920, 7
        %v922 = vsub.s32 %v919, %v921
        %v923 = vrot.slane %v915, %v922
        %v924 = vcombine.high %v923, %v923
        %v927 = vmul.f32 %v913, %v923
        %v928 = vmul.f32 %v912, %v924
        %v929 = vadd.f32 %v833, %v927
        %v930 = vadd.f32 %v834, %v928
        %931 = vrot.lane.b32.xlu0 %v640, 30
        %v932 = vpop.permute.xlu0 %931
        %933 = vrot.lane.b32.xlu0 %v641, 30
        %v934 = vpop.permute.xlu0 %933
        %vm935 = vcmp.lt.s32.totalorder %v647, 30
        %v936 = vsel %vm935, %v932, %v934
        %v937 = vsel %vm935, %v934, %v932
        %s938 = scalar_lea.vmem [#allocation8], 48
        %v939 = vld [vmem:[%s938] sm:$0xf]
        %v942 = vunpack.c.l.s4 1983009808
        %v943 = vunpack.c.0.s8 %v942
        %v944 = vlaneseq
        %v945 = vshrl.u32 %v944, 7
        %v946 = vsub.s32 %v943, %v945
        %v947 = vrot.slane %v939, %v946
        %v948 = vcombine.high %v947, %v947
        %v951 = vmul.f32 %v937, %v947
        %v952 = vmul.f32 %v936, %v948
        %v953 = vadd.f32 %v857, %v951
        %v954 = vadd.f32 %v858, %v952
        %955 = vrot.lane.b32.xlu0 %v640, 29
        %v956 = vpop.permute.xlu0 %955
        %957 = vrot.lane.b32.xlu0 %v641, 29
        %v958 = vpop.permute.xlu0 %957
        %vm959 = vcmp.lt.s32.totalorder %v647, 29
        %v960 = vsel %vm959, %v956, %v958
        %v961 = vsel %vm959, %v958, %v956
        %s962 = scalar_lea.vmem [#allocation8], 52
        %v963 = vld [vmem:[%s962] sm:$0xf]
        %v966 = vunpack.c.l.s4 1983009808
        %v967 = vunpack.c.0.s8 %v966
        %v968 = vlaneseq
        %v969 = vshrl.u32 %v968, 7
        %v970 = vsub.s32 %v967, %v969
        %v971 = vrot.slane %v963, %v970
        %v972 = vcombine.high %v971, %v971
        %v975 = vmul.f32 %v961, %v971
        %v976 = vmul.f32 %v960, %v972
        %v977 = vadd.f32 %v881, %v975
        %v978 = vadd.f32 %v882, %v976
        %979 = vrot.lane.b32.xlu0 %v640, 19
        %v980 = vpop.permute.xlu0 %979
        %981 = vrot.lane.b32.xlu0 %v641, 19
        %v982 = vpop.permute.xlu0 %981
        %vm983 = vcmp.lt.s32.totalorder %v647, 19
        %v984 = vsel %vm983, %v980, %v982
        %v985 = vsel %vm983, %v982, %v980
        %s986 = scalar_lea.vmem [#allocation8], 56
        %v987 = vld [vmem:[%s986] sm:$0xf]
        %v990 = vunpack.c.l.s4 1983009808
        %v991 = vunpack.c.0.s8 %v990
        %v992 = vlaneseq
        %v993 = vshrl.u32 %v992, 7
        %v994 = vsub.s32 %v991, %v993
        %v995 = vrot.slane %v987, %v994
        %v996 = vcombine.high %v995, %v995
        %v999 = vmul.f32 %v985, %v995
        %v1000 = vmul.f32 %v984, %v996
        %v1001 = vadd.f32 %v905, %v999
        %v1002 = vadd.f32 %v906, %v1000
        %1003 = vrot.lane.b32.xlu0 %v640, 18
        %v1004 = vpop.permute.xlu0 %1003
        %1005 = vrot.lane.b32.xlu0 %v641, 18
        %v1006 = vpop.permute.xlu0 %1005
        %vm1007 = vcmp.lt.s32.totalorder %v647, 18
        %v1008 = vsel %vm1007, %v1004, %v1006
        %v1009 = vsel %vm1007, %v1006, %v1004
        %s1010 = scalar_lea.vmem [#allocation8], 60
        %v1011 = vld [vmem:[%s1010] sm:$0xf]
        %v1014 = vunpack.c.l.s4 1983009808
        %v1015 = vunpack.c.0.s8 %v1014
        %v1016 = vlaneseq
        %v1017 = vshrl.u32 %v1016, 7
        %v1018 = vsub.s32 %v1015, %v1017
        %v1019 = vrot.slane %v1011, %v1018
        %v1020 = vcombine.high %v1019, %v1019
        %v1023 = vmul.f32 %v1009, %v1019
        %v1024 = vmul.f32 %v1008, %v1020
        %v1025 = vadd.f32 %v929, %v1023
        %v1026 = vadd.f32 %v930, %v1024
        %1027 = vrot.lane.b32.xlu0 %v640, 17
        %v1028 = vpop.permute.xlu0 %1027
        %1029 = vrot.lane.b32.xlu0 %v641, 17
        %v1030 = vpop.permute.xlu0 %1029
        %vm1031 = vcmp.lt.s32.totalorder %v647, 17
        %v1032 = vsel %vm1031, %v1028, %v1030
        %v1033 = vsel %vm1031, %v1030, %v1028
        %s1034 = scalar_lea.vmem [#allocation8], 64
        %v1035 = vld [vmem:[%s1034] sm:$0xf]
        %v1038 = vunpack.c.l.s4 1983009808
        %v1039 = vunpack.c.0.s8 %v1038
        %v1040 = vlaneseq
        %v1041 = vshrl.u32 %v1040, 7
        %v1042 = vsub.s32 %v1039, %v1041
        %v1043 = vrot.slane %v1035, %v1042
        %v1044 = vcombine.high %v1043, %v1043
        %v1047 = vmul.f32 %v1033, %v1043
        %v1048 = vmul.f32 %v1032, %v1044
        %v1049 = vadd.f32 %v953, %v1047
        %v1050 = vadd.f32 %v954, %v1048
        %1051 = vrot.lane.b32.xlu0 %v640, 16
        %v1052 = vpop.permute.xlu0 %1051
        %1053 = vrot.lane.b32.xlu0 %v641, 16
        %v1054 = vpop.permute.xlu0 %1053
        %vm1055 = vcmp.lt.s32.totalorder %v647, 16
        %v1056 = vsel %vm1055, %v1052, %v1054
        %v1057 = vsel %vm1055, %v1054, %v1052
        %s1058 = scalar_lea.vmem [#allocation8], 68
        %v1059 = vld [vmem:[%s1058] sm:$0xf]
        %v1062 = vunpack.c.l.s4 1983009808
        %v1063 = vunpack.c.0.s8 %v1062
        %v1064 = vlaneseq
        %v1065 = vshrl.u32 %v1064, 7
        %v1066 = vsub.s32 %v1063, %v1065
        %v1067 = vrot.slane %v1059, %v1066
        %v1068 = vcombine.high %v1067, %v1067
        %v1071 = vmul.f32 %v1057, %v1067
        %v1072 = vmul.f32 %v1056, %v1068
        %v1073 = vadd.f32 %v977, %v1071
        %v1074 = vadd.f32 %v978, %v1072
        %1075 = vrot.lane.b32.xlu0 %v640, 15
        %v1076 = vpop.permute.xlu0 %1075
        %1077 = vrot.lane.b32.xlu0 %v641, 15
        %v1078 = vpop.permute.xlu0 %1077
        %vm1079 = vcmp.lt.s32.totalorder %v647, 15
        %v1080 = vsel %vm1079, %v1076, %v1078
        %v1081 = vsel %vm1079, %v1078, %v1076
        %s1082 = scalar_lea.vmem [#allocation8], 72
        %v1083 = vld [vmem:[%s1082] sm:$0xf]
        %v1086 = vunpack.c.l.s4 1983009808
        %v1087 = vunpack.c.0.s8 %v1086
        %v1088 = vlaneseq
        %v1089 = vshrl.u32 %v1088, 7
        %v1090 = vsub.s32 %v1087, %v1089
        %v1091 = vrot.slane %v1083, %v1090
        %v1092 = vcombine.high %v1091, %v1091
        %v1095 = vmul.f32 %v1081, %v1091
        %v1096 = vmul.f32 %v1080, %v1092
        %v1097 = vadd.f32 %v1001, %v1095
        %v1098 = vadd.f32 %v1002, %v1096
        %1099 = vrot.lane.b32.xlu0 %v640, 14
        %v1100 = vpop.permute.xlu0 %1099
        %1101 = vrot.lane.b32.xlu0 %v641, 14
        %v1102 = vpop.permute.xlu0 %1101
        %vm1103 = vcmp.lt.s32.totalorder %v647, 14
        %v1104 = vsel %vm1103, %v1100, %v1102
        %v1105 = vsel %vm1103, %v1102, %v1100
        %s1106 = scalar_lea.vmem [#allocation8], 76
        %v1107 = vld [vmem:[%s1106] sm:$0xf]
        %v1110 = vunpack.c.l.s4 1983009808
        %v1111 = vunpack.c.0.s8 %v1110
        %v1112 = vlaneseq
        %v1113 = vshrl.u32 %v1112, 7
        %v1114 = vsub.s32 %v1111, %v1113
        %v1115 = vrot.slane %v1107, %v1114
        %v1116 = vcombine.high %v1115, %v1115
        %v1119 = vmul.f32 %v1105, %v1115
        %v1120 = vmul.f32 %v1104, %v1116
        %v1121 = vadd.f32 %v1025, %v1119
        %v1122 = vadd.f32 %v1026, %v1120
        %1123 = vrot.lane.b32.xlu0 %v640, 13
        %v1124 = vpop.permute.xlu0 %1123
        %1125 = vrot.lane.b32.xlu0 %v641, 13
        %v1126 = vpop.permute.xlu0 %1125
        %vm1127 = vcmp.lt.s32.totalorder %v647, 13
        %v1128 = vsel %vm1127, %v1124, %v1126
        %v1129 = vsel %vm1127, %v1126, %v1124
        %s1130 = scalar_lea.vmem [#allocation8], 80
        %v1131 = vld [vmem:[%s1130] sm:$0xf]
        %v1134 = vunpack.c.l.s4 1983009808
        %v1135 = vunpack.c.0.s8 %v1134
        %v1136 = vlaneseq
        %v1137 = vshrl.u32 %v1136, 7
        %v1138 = vsub.s32 %v1135, %v1137
        %v1139 = vrot.slane %v1131, %v1138
        %v1140 = vcombine.high %v1139, %v1139
        %v1143 = vmul.f32 %v1129, %v1139
        %v1144 = vmul.f32 %v1128, %v1140
        %v1145 = vadd.f32 %v1049, %v1143
        %v1146 = vadd.f32 %v1050, %v1144
        %1147 = vrot.lane.b32.xlu0 %v640, 3
        %v1148 = vpop.permute.xlu0 %1147
        %1149 = vrot.lane.b32.xlu0 %v641, 3
        %v1150 = vpop.permute.xlu0 %1149
        %vm1151 = vcmp.lt.s32.totalorder %v647, 3
        %v1152 = vsel %vm1151, %v1148, %v1150
        %v1153 = vsel %vm1151, %v1150, %v1148
        %s1154 = scalar_lea.vmem [#allocation8], 84
        %v1155 = vld [vmem:[%s1154] sm:$0xf]
        %v1158 = vunpack.c.l.s4 1983009808
        %v1159 = vunpack.c.0.s8 %v1158
        %v1160 = vlaneseq
        %v1161 = vshrl.u32 %v1160, 7
        %v1162 = vsub.s32 %v1159, %v1161
        %v1163 = vrot.slane %v1155, %v1162
        %v1164 = vcombine.high %v1163, %v1163
        %v1167 = vmul.f32 %v1153, %v1163
        %v1168 = vmul.f32 %v1152, %v1164
        %v1169 = vadd.f32 %v1073, %v1167
        %v1170 = vadd.f32 %v1074, %v1168
        %1171 = vrot.lane.b32.xlu0 %v640, 2
        %v1172 = vpop.permute.xlu0 %1171
        %1173 = vrot.lane.b32.xlu0 %v641, 2
        %v1174 = vpop.permute.xlu0 %1173
        %vm1175 = vcmp.lt.s32.totalorder %v647, 2
        %v1176 = vsel %vm1175, %v1172, %v1174
        %v1177 = vsel %vm1175, %v1174, %v1172
        %s1178 = scalar_lea.vmem [#allocation8], 88
        %v1179 = vld [vmem:[%s1178] sm:$0xf]
        %v1182 = vunpack.c.l.s4 1983009808
        %v1183 = vunpack.c.0.s8 %v1182
        %v1184 = vlaneseq
        %v1185 = vshrl.u32 %v1184, 7
        %v1186 = vsub.s32 %v1183, %v1185
        %v1187 = vrot.slane %v1179, %v1186
        %v1188 = vcombine.high %v1187, %v1187
        %v1191 = vmul.f32 %v1177, %v1187
        %v1192 = vmul.f32 %v1176, %v1188
        %v1193 = vadd.f32 %v1097, %v1191
        %v1194 = vadd.f32 %v1098, %v1192
        %1195 = vrot.lane.b32.xlu0 %v640, 1
        %v1196 = vpop.permute.xlu0 %1195
        %1197 = vrot.lane.b32.xlu0 %v641, 1
        %v1198 = vpop.permute.xlu0 %1197
        %vm1199 = vcmp.lt.s32.totalorder %v647, 1
        %v1200 = vsel %vm1199, %v1196, %v1198
        %v1201 = vsel %vm1199, %v1198, %v1196
        %s1202 = scalar_lea.vmem [#allocation8], 92
        %v1203 = vld [vmem:[%s1202] sm:$0xf]
        %v1206 = vunpack.c.l.s4 1983009808
        %v1207 = vunpack.c.0.s8 %v1206
        %v1208 = vlaneseq
        %v1209 = vshrl.u32 %v1208, 7
        %v1210 = vsub.s32 %v1207, %v1209
        %v1211 = vrot.slane %v1203, %v1210
        %v1212 = vcombine.high %v1211, %v1211
        %v1215 = vmul.f32 %v1201, %v1211
        %v1216 = vmul.f32 %v1200, %v1212
        %v1217 = vadd.f32 %v1121, %v1215
        %v1218 = vadd.f32 %v1122, %v1216
        %s1219 = scalar_lea.vmem [#allocation8], 96
        %v1220 = vld [vmem:[%s1219] sm:$0xf]
        %v1223 = vunpack.c.l.s4 1983009808
        %v1224 = vunpack.c.0.s8 %v1223
        %v1225 = vlaneseq
        %v1226 = vshrl.u32 %v1225, 7
        %v1227 = vsub.s32 %v1224, %v1226
        %v1228 = vrot.slane %v1220, %v1227
        %v1229 = vcombine.high %v1228, %v1228
        %v1232 = vmul.f32 %v640, %v1228
        %v1233 = vmul.f32 %v641, %v1229
        %v1234 = vadd.f32 %v1145, %v1232
        %v1235 = vadd.f32 %v1146, %v1233
        %1236 = vrot.lane.b32.xlu0 %v640, 127
        %v1237 = vpop.permute.xlu0 %1236
        %1238 = vrot.lane.b32.xlu0 %v641, 127
        %v1239 = vpop.permute.xlu0 %1238
        %vm1240 = vcmp.lt.s32.totalorder %v647, 127
        %v1241 = vsel %vm1240, %v1237, %v1239
        %v1242 = vsel %vm1240, %v1239, %v1237
        %s1243 = scalar_lea.vmem [#allocation8], 100
        %v1244 = vld [vmem:[%s1243] sm:$0xf]
        %v1247 = vunpack.c.l.s4 1983009808
        %v1248 = vunpack.c.0.s8 %v1247
        %v1249 = vlaneseq
        %v1250 = vshrl.u32 %v1249, 7
        %v1251 = vsub.s32 %v1248, %v1250
        %v1252 = vrot.slane %v1244, %v1251
        %v1253 = vcombine.high %v1252, %v1252
        %v1256 = vmul.f32 %v1241, %v1252
        %v1257 = vmul.f32 %v1242, %v1253
        %v1258 = vadd.f32 %v1169, %v1256
        %v1259 = vadd.f32 %v1170, %v1257
        %1260 = vrot.lane.b32.xlu0 %v640, 126
        %v1261 = vpop.permute.xlu0 %1260
        %1262 = vrot.lane.b32.xlu0 %v641, 126
        %v1263 = vpop.permute.xlu0 %1262
        %vm1264 = vcmp.lt.s32.totalorder %v647, 126
        %v1265 = vsel %vm1264, %v1261, %v1263
        %v1266 = vsel %vm1264, %v1263, %v1261
        %s1267 = scalar_lea.vmem [#allocation8], 104
        %v1268 = vld [vmem:[%s1267] sm:$0xf]
        %v1271 = vunpack.c.l.s4 1983009808
        %v1272 = vunpack.c.0.s8 %v1271
        %v1273 = vlaneseq
        %v1274 = vshrl.u32 %v1273, 7
        %v1275 = vsub.s32 %v1272, %v1274
        %v1276 = vrot.slane %v1268, %v1275
        %v1277 = vcombine.high %v1276, %v1276
        %v1280 = vmul.f32 %v1265, %v1276
        %v1281 = vmul.f32 %v1266, %v1277
        %v1282 = vadd.f32 %v1193, %v1280
        %v1283 = vadd.f32 %v1194, %v1281
        %1284 = vrot.lane.b32.xlu0 %v640, 125
        %v1285 = vpop.permute.xlu0 %1284
        %1286 = vrot.lane.b32.xlu0 %v641, 125
        %v1287 = vpop.permute.xlu0 %1286
        %vm1288 = vcmp.lt.s32.totalorder %v647, 125
        %v1289 = vsel %vm1288, %v1285, %v1287
        %v1290 = vsel %vm1288, %v1287, %v1285
        %s1291 = scalar_lea.vmem [#allocation8], 108
        %v1292 = vld [vmem:[%s1291] sm:$0xf]
        %v1295 = vunpack.c.l.s4 1983009808
        %v1296 = vunpack.c.0.s8 %v1295
        %v1297 = vlaneseq
        %v1298 = vshrl.u32 %v1297, 7
        %v1299 = vsub.s32 %v1296, %v1298
        %v1300 = vrot.slane %v1292, %v1299
        %v1301 = vcombine.high %v1300, %v1300
        %v1304 = vmul.f32 %v1289, %v1300
        %v1305 = vmul.f32 %v1290, %v1301
        %v1306 = vadd.f32 %v1217, %v1304
        %v1307 = vadd.f32 %v1218, %v1305
        %1308 = vrot.lane.b32.xlu0 %v640, 115
        %v1309 = vpop.permute.xlu0 %1308
        %1310 = vrot.lane.b32.xlu0 %v641, 115
        %v1311 = vpop.permute.xlu0 %1310
        %vm1312 = vcmp.lt.s32.totalorder %v647, 115
        %v1313 = vsel %vm1312, %v1309, %v1311
        %v1314 = vsel %vm1312, %v1311, %v1309
        %s1315 = scalar_lea.vmem [#allocation8], 112
        %v1316 = vld [vmem:[%s1315] sm:$0xf]
        %v1319 = vunpack.c.l.s4 1983009808
        %v1320 = vunpack.c.0.s8 %v1319
        %v1321 = vlaneseq
        %v1322 = vshrl.u32 %v1321, 7
        %v1323 = vsub.s32 %v1320, %v1322
        %v1324 = vrot.slane %v1316, %v1323
        %v1325 = vcombine.high %v1324, %v1324
        %v1328 = vmul.f32 %v1313, %v1324
        %v1329 = vmul.f32 %v1314, %v1325
        %v1330 = vadd.f32 %v1234, %v1328
        %v1331 = vadd.f32 %v1235, %v1329
        %1332 = vrot.lane.b32.xlu0 %v640, 114
        %v1333 = vpop.permute.xlu0 %1332
        %1334 = vrot.lane.b32.xlu0 %v641, 114
        %v1335 = vpop.permute.xlu0 %1334
        %vm1336 = vcmp.lt.s32.totalorder %v647, 114
        %v1337 = vsel %vm1336, %v1333, %v1335
        %v1338 = vsel %vm1336, %v1335, %v1333
        %s1339 = scalar_lea.vmem [#allocation8], 116
        %v1340 = vld [vmem:[%s1339] sm:$0xf]
        %v1343 = vunpack.c.l.s4 1983009808
        %v1344 = vunpack.c.0.s8 %v1343
        %v1345 = vlaneseq
        %v1346 = vshrl.u32 %v1345, 7
        %v1347 = vsub.s32 %v1344, %v1346
        %v1348 = vrot.slane %v1340, %v1347
        %v1349 = vcombine.high %v1348, %v1348
        %v1352 = vmul.f32 %v1337, %v1348
        %v1353 = vmul.f32 %v1338, %v1349
        %v1354 = vadd.f32 %v1258, %v1352
        %v1355 = vadd.f32 %v1259, %v1353
        %1356 = vrot.lane.b32.xlu0 %v640, 113
        %v1357 = vpop.permute.xlu0 %1356
        %1358 = vrot.lane.b32.xlu0 %v641, 113
        %v1359 = vpop.permute.xlu0 %1358
        %vm1360 = vcmp.lt.s32.totalorder %v647, 113
        %v1361 = vsel %vm1360, %v1357, %v1359
        %v1362 = vsel %vm1360, %v1359, %v1357
        %s1363 = scalar_lea.vmem [#allocation8], 120
        %v1364 = vld [vmem:[%s1363] sm:$0xf]
        %v1367 = vunpack.c.l.s4 1983009808
        %v1368 = vunpack.c.0.s8 %v1367
        %v1369 = vlaneseq
        %v1370 = vshrl.u32 %v1369, 7
        %v1371 = vsub.s32 %v1368, %v1370
        %v1372 = vrot.slane %v1364, %v1371
        %v1373 = vcombine.high %v1372, %v1372
        %v1376 = vmul.f32 %v1361, %v1372
        %v1377 = vmul.f32 %v1362, %v1373
        %v1378 = vadd.f32 %v1282, %v1376
        %v1379 = vadd.f32 %v1283, %v1377
        %1380 = vrot.lane.b32.xlu0 %v640, 112
        %v1381 = vpop.permute.xlu0 %1380
        %1382 = vrot.lane.b32.xlu0 %v641, 112
        %v1383 = vpop.permute.xlu0 %1382
        %vm1384 = vcmp.lt.s32.totalorder %v647, 112
        %v1385 = vsel %vm1384, %v1381, %v1383
        %v1386 = vsel %vm1384, %v1383, %v1381
        %s1387 = scalar_lea.vmem [#allocation8], 124
        %v1388 = vld [vmem:[%s1387] sm:$0xf]
        %v1391 = vunpack.c.l.s4 1983009808
        %v1392 = vunpack.c.0.s8 %v1391
        %v1393 = vlaneseq
        %v1394 = vshrl.u32 %v1393, 7
        %v1395 = vsub.s32 %v1392, %v1394
        %v1396 = vrot.slane %v1388, %v1395
        %v1397 = vcombine.high %v1396, %v1396
        %v1400 = vmul.f32 %v1385, %v1396
        %v1401 = vmul.f32 %v1386, %v1397
        %v1402 = vadd.f32 %v1306, %v1400
        %v1403 = vadd.f32 %v1307, %v1401
        %1404 = vrot.lane.b32.xlu0 %v640, 111
        %v1405 = vpop.permute.xlu0 %1404
        %1406 = vrot.lane.b32.xlu0 %v641, 111
        %v1407 = vpop.permute.xlu0 %1406
        %vm1408 = vcmp.lt.s32.totalorder %v647, 111
        %v1409 = vsel %vm1408, %v1405, %v1407
        %v1410 = vsel %vm1408, %v1407, %v1405
        %s1411 = scalar_lea.vmem [#allocation8], 128
        %v1412 = vld [vmem:[%s1411] sm:$0xf]
        %v1415 = vunpack.c.l.s4 1983009808
        %v1416 = vunpack.c.0.s8 %v1415
        %v1417 = vlaneseq
        %v1418 = vshrl.u32 %v1417, 7
        %v1419 = vsub.s32 %v1416, %v1418
        %v1420 = vrot.slane %v1412, %v1419
        %v1421 = vcombine.high %v1420, %v1420
        %v1424 = vmul.f32 %v1409, %v1420
        %v1425 = vmul.f32 %v1410, %v1421
        %v1426 = vadd.f32 %v1330, %v1424
        %v1427 = vadd.f32 %v1331, %v1425
        %1428 = vrot.lane.b32.xlu0 %v640, 110
        %v1429 = vpop.permute.xlu0 %1428
        %1430 = vrot.lane.b32.xlu0 %v641, 110
        %v1431 = vpop.permute.xlu0 %1430
        %vm1432 = vcmp.lt.s32.totalorder %v647, 110
        %v1433 = vsel %vm1432, %v1429, %v1431
        %v1434 = vsel %vm1432, %v1431, %v1429
        %s1435 = scalar_lea.vmem [#allocation8], 132
        %v1436 = vld [vmem:[%s1435] sm:$0xf]
        %v1439 = vunpack.c.l.s4 1983009808
        %v1440 = vunpack.c.0.s8 %v1439
        %v1441 = vlaneseq
        %v1442 = vshrl.u32 %v1441, 7
        %v1443 = vsub.s32 %v1440, %v1442
        %v1444 = vrot.slane %v1436, %v1443
        %v1445 = vcombine.high %v1444, %v1444
        %v1448 = vmul.f32 %v1433, %v1444
        %v1449 = vmul.f32 %v1434, %v1445
        %v1450 = vadd.f32 %v1354, %v1448
        %v1451 = vadd.f32 %v1355, %v1449
        %1452 = vrot.lane.b32.xlu0 %v640, 109
        %v1453 = vpop.permute.xlu0 %1452
        %1454 = vrot.lane.b32.xlu0 %v641, 109
        %v1455 = vpop.permute.xlu0 %1454
        %vm1456 = vcmp.lt.s32.totalorder %v647, 109
        %v1457 = vsel %vm1456, %v1453, %v1455
        %v1458 = vsel %vm1456, %v1455, %v1453
        %s1459 = scalar_lea.vmem [#allocation8], 136
        %v1460 = vld [vmem:[%s1459] sm:$0xf]
        %v1463 = vunpack.c.l.s4 1983009808
        %v1464 = vunpack.c.0.s8 %v1463
        %v1465 = vlaneseq
        %v1466 = vshrl.u32 %v1465, 7
        %v1467 = vsub.s32 %v1464, %v1466
        %v1468 = vrot.slane %v1460, %v1467
        %v1469 = vcombine.high %v1468, %v1468
        %v1472 = vmul.f32 %v1457, %v1468
        %v1473 = vmul.f32 %v1458, %v1469
        %v1474 = vadd.f32 %v1378, %v1472
        %v1475 = vadd.f32 %v1379, %v1473
        %1476 = vrot.lane.b32.xlu0 %v640, 99
        %v1477 = vpop.permute.xlu0 %1476
        %1478 = vrot.lane.b32.xlu0 %v641, 99
        %v1479 = vpop.permute.xlu0 %1478
        %vm1480 = vcmp.lt.s32.totalorder %v647, 99
        %v1481 = vsel %vm1480, %v1477, %v1479
        %v1482 = vsel %vm1480, %v1479, %v1477
        %s1483 = scalar_lea.vmem [#allocation8], 140
        %v1484 = vld [vmem:[%s1483] sm:$0xf]
        %v1487 = vunpack.c.l.s4 1983009808
        %v1488 = vunpack.c.0.s8 %v1487
        %v1489 = vlaneseq
        %v1490 = vshrl.u32 %v1489, 7
        %v1491 = vsub.s32 %v1488, %v1490
        %v1492 = vrot.slane %v1484, %v1491
        %v1493 = vcombine.high %v1492, %v1492
        %v1496 = vmul.f32 %v1481, %v1492
        %v1497 = vmul.f32 %v1482, %v1493
        %v1498 = vadd.f32 %v1402, %v1496
        %v1499 = vadd.f32 %v1403, %v1497
        %1500 = vrot.lane.b32.xlu0 %v640, 98
        %v1501 = vpop.permute.xlu0 %1500
        %1502 = vrot.lane.b32.xlu0 %v641, 98
        %v1503 = vpop.permute.xlu0 %1502
        %vm1504 = vcmp.lt.s32.totalorder %v647, 98
        %v1505 = vsel %vm1504, %v1501, %v1503
        %v1506 = vsel %vm1504, %v1503, %v1501
        %s1507 = scalar_lea.vmem [#allocation8], 144
        %v1508 = vld [vmem:[%s1507] sm:$0xf]
        %v1511 = vunpack.c.l.s4 1983009808
        %v1512 = vunpack.c.0.s8 %v1511
        %v1513 = vlaneseq
        %v1514 = vshrl.u32 %v1513, 7
        %v1515 = vsub.s32 %v1512, %v1514
        %v1516 = vrot.slane %v1508, %v1515
        %v1517 = vcombine.high %v1516, %v1516
        %v1520 = vmul.f32 %v1505, %v1516
        %v1521 = vmul.f32 %v1506, %v1517
        %v1522 = vadd.f32 %v1426, %v1520
        %v1523 = vadd.f32 %v1427, %v1521
        %1524 = vrot.lane.b32.xlu0 %v640, 97
        %v1525 = vpop.permute.xlu0 %1524
        %1526 = vrot.lane.b32.xlu0 %v641, 97
        %v1527 = vpop.permute.xlu0 %1526
        %vm1528 = vcmp.lt.s32.totalorder %v647, 97
        %v1529 = vsel %vm1528, %v1525, %v1527
        %v1530 = vsel %vm1528, %v1527, %v1525
        %s1531 = scalar_lea.vmem [#allocation8], 148
        %v1532 = vld [vmem:[%s1531] sm:$0xf]
        %v1535 = vunpack.c.l.s4 1983009808
        %v1536 = vunpack.c.0.s8 %v1535
        %v1537 = vlaneseq
        %v1538 = vshrl.u32 %v1537, 7
        %v1539 = vsub.s32 %v1536, %v1538
        %v1540 = vrot.slane %v1532, %v1539
        %v1541 = vcombine.high %v1540, %v1540
        %v1544 = vmul.f32 %v1529, %v1540
        %v1545 = vmul.f32 %v1530, %v1541
        %v1546 = vadd.f32 %v1450, %v1544
        %v1547 = vadd.f32 %v1451, %v1545
        %1548 = vrot.lane.b32.xlu0 %v640, 96
        %v1549 = vpop.permute.xlu0 %1548
        %1550 = vrot.lane.b32.xlu0 %v641, 96
        %v1551 = vpop.permute.xlu0 %1550
        %vm1552 = vcmp.lt.s32.totalorder %v647, 96
        %v1553 = vsel %vm1552, %v1549, %v1551
        %v1554 = vsel %vm1552, %v1551, %v1549
        %s1555 = scalar_lea.vmem [#allocation8], 152
        %v1556 = vld [vmem:[%s1555] sm:$0xf]
        %v1559 = vunpack.c.l.s4 1983009808
        %v1560 = vunpack.c.0.s8 %v1559
        %v1561 = vlaneseq
        %v1562 = vshrl.u32 %v1561, 7
        %v1563 = vsub.s32 %v1560, %v1562
        %v1564 = vrot.slane %v1556, %v1563
        %v1565 = vcombine.high %v1564, %v1564
        %v1568 = vmul.f32 %v1553, %v1564
        %v1569 = vmul.f32 %v1554, %v1565
        %v1570 = vadd.f32 %v1474, %v1568
        %v1571 = vadd.f32 %v1475, %v1569
        %1572 = vrot.lane.b32.xlu0 %v640, 95
        %v1573 = vpop.permute.xlu0 %1572
        %1574 = vrot.lane.b32.xlu0 %v641, 95
        %v1575 = vpop.permute.xlu0 %1574
        %vm1576 = vcmp.lt.s32.totalorder %v647, 95
        %v1577 = vsel %vm1576, %v1573, %v1575
        %v1578 = vsel %vm1576, %v1575, %v1573
        %s1579 = scalar_lea.vmem [#allocation8], 156
        %v1580 = vld [vmem:[%s1579] sm:$0xf]
        %v1583 = vunpack.c.l.s4 1983009808
        %v1584 = vunpack.c.0.s8 %v1583
        %v1585 = vlaneseq
        %v1586 = vshrl.u32 %v1585, 7
        %v1587 = vsub.s32 %v1584, %v1586
        %v1588 = vrot.slane %v1580, %v1587
        %v1589 = vcombine.high %v1588, %v1588
        %v1592 = vmul.f32 %v1577, %v1588
        %v1593 = vmul.f32 %v1578, %v1589
        %v1594 = vadd.f32 %v1498, %v1592
        %v1595 = vadd.f32 %v1499, %v1593
        %1596 = vrot.lane.b32.xlu0 %v640, 94
        %v1597 = vpop.permute.xlu0 %1596
        %1598 = vrot.lane.b32.xlu0 %v641, 94
        %v1599 = vpop.permute.xlu0 %1598
        %vm1600 = vcmp.lt.s32.totalorder %v647, 94
        %v1601 = vsel %vm1600, %v1597, %v1599
        %v1602 = vsel %vm1600, %v1599, %v1597
        %s1603 = scalar_lea.vmem [#allocation8], 160
        %v1604 = vld [vmem:[%s1603] sm:$0xf]
        %v1607 = vunpack.c.l.s4 1983009808
        %v1608 = vunpack.c.0.s8 %v1607
        %v1609 = vlaneseq
        %v1610 = vshrl.u32 %v1609, 7
        %v1611 = vsub.s32 %v1608, %v1610
        %v1612 = vrot.slane %v1604, %v1611
        %v1613 = vcombine.high %v1612, %v1612
        %v1616 = vmul.f32 %v1601, %v1612
        %v1617 = vmul.f32 %v1602, %v1613
        %v1618 = vadd.f32 %v1522, %v1616
        %v1619 = vadd.f32 %v1523, %v1617
        %1620 = vrot.lane.b32.xlu0 %v640, 93
        %v1621 = vpop.permute.xlu0 %1620
        %1622 = vrot.lane.b32.xlu0 %v641, 93
        %v1623 = vpop.permute.xlu0 %1622
        %vm1624 = vcmp.lt.s32.totalorder %v647, 93
        %v1625 = vsel %vm1624, %v1621, %v1623
        %v1626 = vsel %vm1624, %v1623, %v1621
        %s1627 = scalar_lea.vmem [#allocation8], 164
        %v1628 = vld [vmem:[%s1627] sm:$0xf]
        %v1631 = vunpack.c.l.s4 1983009808
        %v1632 = vunpack.c.0.s8 %v1631
        %v1633 = vlaneseq
        %v1634 = vshrl.u32 %v1633, 7
        %v1635 = vsub.s32 %v1632, %v1634
        %v1636 = vrot.slane %v1628, %v1635
        %v1637 = vcombine.high %v1636, %v1636
        %v1640 = vmul.f32 %v1625, %v1636
        %v1641 = vmul.f32 %v1626, %v1637
        %v1642 = vadd.f32 %v1546, %v1640
        %v1643 = vadd.f32 %v1547, %v1641
        %1644 = vrot.lane.b32.xlu0 %v640, 83
        %v1645 = vpop.permute.xlu0 %1644
        %1646 = vrot.lane.b32.xlu0 %v641, 83
        %v1647 = vpop.permute.xlu0 %1646
        %vm1648 = vcmp.lt.s32.totalorder %v647, 83
        %v1649 = vsel %vm1648, %v1645, %v1647
        %v1650 = vsel %vm1648, %v1647, %v1645
        %s1651 = scalar_lea.vmem [#allocation8], 168
        %v1652 = vld [vmem:[%s1651] sm:$0xf]
        %v1655 = vunpack.c.l.s4 1983009808
        %v1656 = vunpack.c.0.s8 %v1655
        %v1657 = vlaneseq
        %v1658 = vshrl.u32 %v1657, 7
        %v1659 = vsub.s32 %v1656, %v1658
        %v1660 = vrot.slane %v1652, %v1659
        %v1661 = vcombine.high %v1660, %v1660
        %v1664 = vmul.f32 %v1649, %v1660
        %v1665 = vmul.f32 %v1650, %v1661
        %v1666 = vadd.f32 %v1570, %v1664
        %v1667 = vadd.f32 %v1571, %v1665
        %1668 = vrot.lane.b32.xlu0 %v640, 82
        %v1669 = vpop.permute.xlu0 %1668
        %1670 = vrot.lane.b32.xlu0 %v641, 82
        %v1671 = vpop.permute.xlu0 %1670
        %vm1672 = vcmp.lt.s32.totalorder %v647, 82
        %v1673 = vsel %vm1672, %v1669, %v1671
        %v1674 = vsel %vm1672, %v1671, %v1669
        %s1675 = scalar_lea.vmem [#allocation8], 172
        %v1676 = vld [vmem:[%s1675] sm:$0xf]
        %v1679 = vunpack.c.l.s4 1983009808
        %v1680 = vunpack.c.0.s8 %v1679
        %v1681 = vlaneseq
        %v1682 = vshrl.u32 %v1681, 7
        %v1683 = vsub.s32 %v1680, %v1682
        %v1684 = vrot.slane %v1676, %v1683
        %v1685 = vcombine.high %v1684, %v1684
        %v1688 = vmul.f32 %v1673, %v1684
        %v1689 = vmul.f32 %v1674, %v1685
        %v1690 = vadd.f32 %v1594, %v1688
        %v1691 = vadd.f32 %v1595, %v1689
        %1692 = vrot.lane.b32.xlu0 %v640, 81
        %v1693 = vpop.permute.xlu0 %1692
        %1694 = vrot.lane.b32.xlu0 %v641, 81
        %v1695 = vpop.permute.xlu0 %1694
        %vm1696 = vcmp.lt.s32.totalorder %v647, 81
        %v1697 = vsel %vm1696, %v1693, %v1695
        %v1698 = vsel %vm1696, %v1695, %v1693
        %s1699 = scalar_lea.vmem [#allocation8], 176
        %v1700 = vld [vmem:[%s1699] sm:$0xf]
        %v1703 = vunpack.c.l.s4 1983009808
        %v1704 = vunpack.c.0.s8 %v1703
        %v1705 = vlaneseq
        %v1706 = vshrl.u32 %v1705, 7
        %v1707 = vsub.s32 %v1704, %v1706
        %v1708 = vrot.slane %v1700, %v1707
        %v1709 = vcombine.high %v1708, %v1708
        %v1712 = vmul.f32 %v1697, %v1708
        %v1713 = vmul.f32 %v1698, %v1709
        %v1714 = vadd.f32 %v1618, %v1712
        %v1715 = vadd.f32 %v1619, %v1713
        %1716 = vrot.lane.b32.xlu0 %v640, 80
        %v1717 = vpop.permute.xlu0 %1716
        %1718 = vrot.lane.b32.xlu0 %v641, 80
        %v1719 = vpop.permute.xlu0 %1718
        %vm1720 = vcmp.lt.s32.totalorder %v647, 80
        %v1721 = vsel %vm1720, %v1717, %v1719
        %v1722 = vsel %vm1720, %v1719, %v1717
        %s1723 = scalar_lea.vmem [#allocation8], 180
        %v1724 = vld [vmem:[%s1723] sm:$0xf]
        %v1727 = vunpack.c.l.s4 1983009808
        %v1728 = vunpack.c.0.s8 %v1727
        %v1729 = vlaneseq
        %v1730 = vshrl.u32 %v1729, 7
        %v1731 = vsub.s32 %v1728, %v1730
        %v1732 = vrot.slane %v1724, %v1731
        %v1733 = vcombine.high %v1732, %v1732
        %v1736 = vmul.f32 %v1721, %v1732
        %v1737 = vmul.f32 %v1722, %v1733
        %v1738 = vadd.f32 %v1642, %v1736
        %v1739 = vadd.f32 %v1643, %v1737
        %1740 = vrot.lane.b32.xlu0 %v640, 79
        %v1741 = vpop.permute.xlu0 %1740
        %1742 = vrot.lane.b32.xlu0 %v641, 79
        %v1743 = vpop.permute.xlu0 %1742
        %vm1744 = vcmp.lt.s32.totalorder %v647, 79
        %v1745 = vsel %vm1744, %v1741, %v1743
        %v1746 = vsel %vm1744, %v1743, %v1741
        %s1747 = scalar_lea.vmem [#allocation8], 184
        %v1748 = vld [vmem:[%s1747] sm:$0xf]
        %v1751 = vunpack.c.l.s4 1983009808
        %v1752 = vunpack.c.0.s8 %v1751
        %v1753 = vlaneseq
        %v1754 = vshrl.u32 %v1753, 7
        %v1755 = vsub.s32 %v1752, %v1754
        %v1756 = vrot.slane %v1748, %v1755
        %v1757 = vcombine.high %v1756, %v1756
        %v1760 = vmul.f32 %v1745, %v1756
        %v1761 = vmul.f32 %v1746, %v1757
        %v1762 = vadd.f32 %v1666, %v1760
        %v1763 = vadd.f32 %v1667, %v1761
        %1764 = vrot.lane.b32.xlu0 %v640, 78
        %v1765 = vpop.permute.xlu0 %1764
        %1766 = vrot.lane.b32.xlu0 %v641, 78
        %v1767 = vpop.permute.xlu0 %1766
        %vm1768 = vcmp.lt.s32.totalorder %v647, 78
        %v1769 = vsel %vm1768, %v1765, %v1767
        %v1770 = vsel %vm1768, %v1767, %v1765
        %s1771 = scalar_lea.vmem [#allocation8], 188
        %v1772 = vld [vmem:[%s1771] sm:$0xf]
        %v1775 = vunpack.c.l.s4 1983009808
        %v1776 = vunpack.c.0.s8 %v1775
        %v1777 = vlaneseq
        %v1778 = vshrl.u32 %v1777, 7
        %v1779 = vsub.s32 %v1776, %v1778
        %v1780 = vrot.slane %v1772, %v1779
        %v1781 = vcombine.high %v1780, %v1780
        %v1784 = vmul.f32 %v1769, %v1780
        %v1785 = vmul.f32 %v1770, %v1781
        %v1786 = vadd.f32 %v1690, %v1784
        %v1787 = vadd.f32 %v1691, %v1785
        %1788 = vrot.lane.b32.xlu0 %v640, 77
        %v1789 = vpop.permute.xlu0 %1788
        %1790 = vrot.lane.b32.xlu0 %v641, 77
        %v1791 = vpop.permute.xlu0 %1790
        %vm1792 = vcmp.lt.s32.totalorder %v647, 77
        %v1793 = vsel %vm1792, %v1789, %v1791
        %v1794 = vsel %vm1792, %v1791, %v1789
        %s1795 = scalar_lea.vmem [#allocation8], 192
        %v1796 = vld [vmem:[%s1795] sm:$0xf]
        %v1799 = vunpack.c.l.s4 1983009808
        %v1800 = vunpack.c.0.s8 %v1799
        %v1801 = vlaneseq
        %v1802 = vshrl.u32 %v1801, 7
        %v1803 = vsub.s32 %v1800, %v1802
        %v1804 = vrot.slane %v1796, %v1803
        %v1805 = vcombine.high %v1804, %v1804
        %v1808 = vmul.f32 %v1793, %v1804
        %v1809 = vmul.f32 %v1794, %v1805
        %v1810 = vadd.f32 %v1714, %v1808
        %v1811 = vadd.f32 %v1715, %v1809
        %v1812 = vadd.f32 %v1810, %v1738
        %v1813 = vadd.f32 %v1811, %v1739
        %v1814 = vadd.f32 %v1762, %v1786
        %v1815 = vadd.f32 %v1763, %v1787
        %v1816 = vadd.f32 %v1812, %v1814
        %v1817 = vadd.f32 %v1813, %v1815
        %v1820 = vrot.slane %v1816, 1
        %v1821 = vrot.slane %v1817, 1
        %v1824 = vadd.f32 %v1816, %v1820
        %v1825 = vadd.f32 %v1817, %v1821
        %s1826 = sld [smem:[#allocation2]]
        %v1827 = vstv %s1826
        %v1828 = vadd.f32 %v1824, %v1827
        %v1829 = vadd.f32 %v1825, %v1827
        %v1830 = vsub.f32 0.0, %v1828
        %v1831 = vsub.f32 0.0, %v1829
        %v1832 = vmul.f32 %v1830, 1.442695
        %v1833 = vpow.pop %v1832
        %v1834 = vmul.f32 %v1831, 1.442695
        %v1835 = vpow.pop %v1834
        %v1836 = vadd.f32 %v1833, 1.0
        %v1837 = vadd.f32 %v1835, 1.0
        %v1838 = vrcp.pop %v1836
        %v1839 = vrcp.pop %v1837
        %v1840 = vlaneseq
        %v1841 = vshrl.u32 %v1840, 7
        %v1842 = vsub.s32 0, %v1841
        %v1843 = vrot.slane %v1838, %v1842
        %v1844 = vlaneseq
        %v1845 = vshrl.u32 %v1844, 7
        %v1846 = vsub.s32 0, %v1845
        %v1847 = vrot.slane %v1839, %v1846
        %v1848 = vmul.f32 %v592, %v1843
        %v1849 = vmul.f32 %v593, %v1847
        %v1850 = vmul.f32 %v594, %v1843
        %v1851 = vmul.f32 %v595, %v1847
        %v1852 = vmul.f32 %v596, %v1843
        %v1853 = vmul.f32 %v597, %v1847
        %v1854 = vmul.f32 %v598, %v1843
        %v1855 = vmul.f32 %v599, %v1847
        %1856 = vst [vmem:[%s326] sm:$0xff] %v1848
        %1857 = vst [vmem:[%s326 + $0x8] sm:$0xff] %v1849
        %1858 = vst [vmem:[%s326 + $0x10] sm:$0xff] %v1850
        %1859 = vst [vmem:[%s326 + $0x18] sm:$0xff] %v1851
        %1860 = vst [vmem:[%s326 + $0x20] sm:$0xff] %v1852
        %1861 = vst [vmem:[%s326 + $0x28] sm:$0xff] %v1853
        %1862 = vst [vmem:[%s326 + $0x30] sm:$0xff] %v1854
        %1863 = vst [vmem:[%s326 + $0x38] sm:$0xff] %v1855
        %s1864 = sand.u32 %s187, 1
        %s1865 = scalar_lea.sflag [#allocation5], %s1864
        %s1866 = sand.u32 %s187, 1
        %s1867 = smul.addr %s1866, 64
        %s1868 = scalar_lea.vmem [#allocation10], %s1867
        // Predicated region
        $region61: #{tpu_custom_call.1} parent=47 // pred_check
          %p1869 = pneg %p197
        $region62: #{tpu_custom_call.1} parent=47 // pred_check_branch
          %1871 = sbr.rel (%p1869) target = $region64
        $region63: #{tpu_custom_call.1} parent=47 // pred_region
          %s1873 = ssub.s32 1024, 1024
          %1874 = vsyncadd %s1865, %s1873
          %s1875 = smul.addr %s27, 8
          %s1876 = smul.addr %s1875, 128
          %s1877 = scalar_lea.hbm %s7, %s1876
          %s1878 = sshll.u32 %s1868, 4
          %s1879 = int_to_ptr.vmem [resolvable:$true] %s1878
          %1884 = dma.vmem_to_hbm [thread:$0]  %s1879, 1024, %s1877, %s1865, 256, 256, 16
        $region64: #{tpu_custom_call.1} parent=47 // pred_fallthru
          _
      $region48: #{tpu_custom_call.1} parent=5 // pred_fallthru
        _
      %p1885 = scmp.le.s32.totalorder 2, %s22
      // Predicated region
      $region65: #{tpu_custom_call.1} parent=5 // pred_check
        %p1886 = pneg %p1885
      $region66: #{tpu_custom_call.1} parent=5 // pred_check_branch
        %1888 = sbr.rel (%p1886) target = $region68
      $region67: #{tpu_custom_call.1} parent=5 // pred_region
        %s1889 = ssub.s32 %s22, 2
        // Predicated region
        $region69: #{tpu_custom_call.1} parent=67 // pred_check
          %p1890 = pneg %p203
        $region70: #{tpu_custom_call.1} parent=67 // pred_check_branch
          %1892 = sbr.rel (%p1890) target = $region72
        $region71: #{tpu_custom_call.1} parent=67 // pred_region
          %s1893 = sand.u32 %s188, 1
          %s1894 = scalar_lea.sflag [#allocation5], %s1893
          %s1895 = sand.u32 %s188, 1
          %s1896 = smul.addr %s1895, 64
          %s1897 = scalar_lea.vmem [#allocation10], %s1896
          %1898 = dma.done %s1894, 1024
        $region72: #{tpu_custom_call.1} parent=67 // pred_fallthru
          _
      $region68: #{tpu_custom_call.1} parent=5 // pred_fallthru
        _
    $region6: #{tpu_custom_call.1} parent=1 // loop_footer
      %s26 = sadd.s32 1, %s22
    $region7: #{tpu_custom_call.1} parent=1 // loop_footer_branch
      %21 = sbr.rel target = $region3
    $region8: #{tpu_custom_call.1} parent=1 // loop_exit
      _
    %1899 = vsyncpa [#allocation4], 1
    %s1900 = scalar_lea.sflag [#allocation4], 1
    %1901 = vsyncpa %s1900, 1
    %1902 = vsyncpa [#allocation9], 1
    %1903 = vsyncpa [#allocation5], 1
    %s1904 = scalar_lea.sflag [#allocation5], 1
    %1905 = vsyncpa %s1904, 1
    %1906 = vsyncpa [#allocation6], 1
    %s1907 = scalar_lea.sflag [#allocation6], 1
    %1908 = vsyncpa %s1907, 1

</llo_original>
